<compile_context>
chip_gen: v7x
topology: tpu7x:2x2x1
jax: 0.10.0
libtpu: 0.0.40
codegen_flags: <defaults>
</compile_context>

<pallas_src>
import functools

import jax
import jax.numpy as jnp
import numpy as np
from jax import lax
from jax.experimental import pallas as pl
from jax.experimental.pallas import tpu as pltpu

LN_EPS = 1e-5   # torch.nn.LayerNorm default
RI_EPS = 1e-7   # rifeat epsilon


def _layernorm(x, gamma, beta):
    """LayerNorm over the last axis (pure-JAX reference only)."""
    mu = jnp.mean(x, axis=-1, keepdims=True)
    var = jnp.mean((x - mu) ** 2, axis=-1, keepdims=True)
    return (x - mu) / jnp.sqrt(var + LN_EPS) * gamma + beta


def so3_kernel(pts_ref, nbr_ref, w1_ref, w2s_ref, eb_ref, po_ref, out_ref,
               *, K, HID, RANK):
    f32 = jnp.float32

    # ---- rifeat: planar xyz, points on lanes; pure element-wise VPU/EUP ----
    nbr = nbr_ref[...].astype(f32)          # (3, K, tm)
    pts = pts_ref[...].astype(f32)          # (3, 1, tm)
    nx, ny, nz = nbr[0], nbr[1], nbr[2]     # (K, tm) each
    px, py, pz = pts[0], pts[1], pts[2]     # (1, tm) each

    mx = jnp.mean(nx, axis=0, keepdims=True)
    my = jnp.mean(ny, axis=0, keepdims=True)
    mz = jnp.mean(nz, axis=0, keepdims=True)

    l1x, l1y, l1z = mx - nx, my - ny, mz - nz       # (K, tm)
    l2x, l2y, l2z = nx - px, ny - py, nz - pz       # (K, tm)
    l3x, l3y, l3z = px - mx, py - my, pz - mz       # (1, tm)

    l1n = jnp.sqrt(l1x * l1x + l1y * l1y + l1z * l1z)   # (K, tm)
    l2n = jnp.sqrt(l2x * l2x + l2y * l2y + l2z * l2z)   # (K, tm)
    l3n = jnp.sqrt(l3x * l3x + l3y * l3y + l3z * l3z)   # (1, tm)

    def recip(d):
        # EUP approx reciprocal + one Newton step: divide work leaves the
        # binding VALU slot, accuracy stays ~f32 (keeps the 2e-3 check safe).
        r = pl.reciprocal(d, approx=True)
        return r * (2.0 - d * r)

    t1 = (l1x * l2x + l1y * l2y + l1z * l2z) * recip(l1n * l2n + RI_EPS)
    t2 = (l2x * l3x + l2y * l3y + l2z * l3z) * recip(l2n * l3n + RI_EPS)
    t3 = (l3x * l1x + l3y * l1y + l3z * l1z) * recip(l3n * l1n + RI_EPS)

    # One lane-dense feature stack for all K neighbours; row = j*K + k.
    feat = jnp.concatenate(
        [l1n, l2n, jnp.broadcast_to(l3n, l1n.shape), t1, t2, t3], axis=0)  # (6K, tm)

    # ---- parameter slabs (static, sublane/lane aligned slices) -------------
    w1_big = w1_ref[...]                     # (K*HID, 6K)  LN1-mean pre-folded
    w2s = w2s_ref[...]                       # (K*RANK + K, K*HID)
    w2_big = w2s[:K * RANK, :]               # block-diagonal layer-2 weight
    srow = w2s[K * RANK:, :]                 # (K, K*HID)   per-k 1/HID selector
    eb = eb_ref[...]                         # (K*HID, K + 2)
    eg = eb[:, :K]                           # (K*HID, K)   gamma1 expansion
    b1_big = eb[:, K:K + 1]                  # (K*HID, 1)   centred bias
    be1_big = eb[:, K + 1:K + 2]             # (K*HID, 1)
    po = po_ref[...]                         # (NOUT, RANK + 3)
    wo_c = po[:, :RANK]                      # LN_out-mean pre-folded
    bo_eff = po[:, RANK:RANK + 1]            # bo (centred) + wo_c @ b2
    go = po[:, RANK + 1:RANK + 2]
    beo = po[:, RANK + 2:RANK + 3]

    # ---- layer 1 (all K fused in one MXU pass) + LayerNorm + ReLU ----------
    # LN mean already folded into (w1_big, b1_big) => h is centred.
    h = jnp.dot(w1_big, feat, preferred_element_type=f32) + b1_big    # (K*HID, tm)
    var = jnp.dot(srow, h * h, preferred_element_type=f32)            # (K, tm)  MXU reduce
    inv = lax.rsqrt(var + LN_EPS)                                     # (K, tm)  EUP
    scale = jnp.dot(eg, inv, preferred_element_type=f32)              # (K*HID, tm): g1[c]*inv[k]
    a = jnp.maximum(h * scale + be1_big, 0.0)                         # ReLU

    # ---- layer 2 (block-diagonal, one MXU pass) + max over K ---------------
    # b2 commutes with the max; it is folded into bo_eff on the host.
    h2 = jnp.dot(w2_big, a, preferred_element_type=f32)               # (K*RANK, tm)
    contracted = h2[0:RANK, :]
    for k in range(1, K):                    # static sublane-aligned slices
        contracted = jnp.maximum(contracted, h2[k * RANK:(k + 1) * RANK, :])

    # ---- outnet + final LayerNorm (mean + b2 folded); lane-dense store -----
    o = jnp.dot(wo_c, contracted, preferred_element_type=f32) + bo_eff  # (NOUT, tm)
    ovar = jnp.mean(o * o, axis=0, keepdims=True)
    out_ref[...] = (o * (lax.rsqrt(ovar + LN_EPS) * go) + beo).astype(out_ref.dtype)


@functools.partial(jax.jit, static_argnames=("tm",))
def sparse_so3_conv(pts, nbr_pts, params, *, tm=256):
    assert tm % 128 == 0, "tm must be a multiple of 128 (lane width)"
    B, N, _ = pts.shape
    K = nbr_pts.shape[2]
    M = B * N
    Mp = ((M + tm - 1) // tm) * tm          # zero-pad rows to a full tile

    (w1, b1, g1, be1, w2, b2, wo, bo, go, beo) = params
    f32 = jnp.float32
    HID = w1.shape[1]
    RANK = w2.shape[1]
    NOUT = wo.shape[1]

    # ---- planar, lane-dense data layout (layout plumbing only) -------------
    # TODO(synk): if the upstream neighbour gather can emit (3, K, M) directly,
    # drop these transposes -- they are a full HBM round-trip of nbr_pts that
    # can out-cost this low-FLOP kernel (worst on v5e HBM bandwidth).
    pts_p = jnp.transpose(pts.reshape(M, 3), (1, 0))[:, None, :]       # (3, 1, M)
    nbr_p = jnp.transpose(nbr_pts.reshape(M, K, 3), (2, 1, 0))         # (3, K, M)
    if Mp != M:
        pts_p = jnp.pad(pts_p, ((0, 0), (0, 0), (0, Mp - M)))
        nbr_p = jnp.pad(nbr_p, ((0, 0), (0, 0), (0, Mp - M)))

    # ---- host-side parameter folding ----------------------------------------
    w1_cm = w1.T.astype(f32)                                   # (HID, 6)
    w1_cmc = w1_cm - jnp.mean(w1_cm, axis=0, keepdims=True)    # fold LN1 mean
    b1_c = b1.reshape(-1).astype(f32) - jnp.mean(b1).astype(f32)
    g1_v = g1.reshape(-1).astype(f32)
    be1_v = be1.reshape(-1).astype(f32)
    w2_cm = w2.T.astype(f32)                                   # (RANK, HID)
    b2_v = b2.reshape(-1).astype(f32)
    wo_cm = wo.T.astype(f32)                                   # (NOUT, RANK)
    wo_c = wo_cm - jnp.mean(wo_cm, axis=0, keepdims=True)      # fold LN_out mean
    bo_c = bo.reshape(-1).astype(f32) - jnp.mean(bo).astype(f32)
    bo_eff = (wo_c @ b2_v + bo_c).reshape(NOUT, 1)             # fold kernel-MLP b2
    go_c = go.reshape(NOUT, 1).astype(f32)
    beo_c = beo.reshape(NOUT, 1).astype(f32)

    eyeK = jnp.eye(K, dtype=f32)
    # Layer-1 block weight: [k*HID + c, j*K + l] = w1_cmc[c, j] * [k == l]
    w1_big = jnp.einsum("cj,kl->kcjl", w1_cmc, eyeK).reshape(K * HID, 6 * K)
    b1_big = jnp.tile(b1_c, K).reshape(K * HID, 1)
    be1_big = jnp.tile(be1_v, K).reshape(K * HID, 1)
    # gamma1-scaled per-k expansion: [k*HID + c, l] = g1[c] * [k == l]
    eg = jnp.einsum("kl,c->kcl", eyeK, g1_v).reshape(K * HID, K)
    # per-k mean selector for the LN variance: [k, l*HID + c] = [k == l] / HID
    srow = jnp.einsum("kl,c->klc", eyeK,
                      jnp.full((HID,), 1.0 / HID, f32)).reshape(K, K * HID)
    # Layer-2 block-diagonal weight (K*RANK, K*HID)
    w2_big = jnp.kron(eyeK, w2_cm)

    # Pack into 4 slabs; every matmul operand stays at a 0 / 8-multiple offset.
    slab_w1 = w1_big                                              # (K*HID, 6K)
    slab_w2s = jnp.concatenate([w2_big, srow], axis=0)            # (K*RANK+K, K*HID)
    slab_eb = jnp.concatenate([eg, b1_big, be1_big], axis=1)      # (K*HID, K+2)
    slab_out = jnp.concatenate([wo_c, bo_eff, go_c, beo_c], axis=1)  # (NOUT, RANK+3)

    def full(a):
        zeros = (0,) * a.ndim
        return pl.BlockSpec(a.shape, lambda i: zeros)

    kern = functools.partial(so3_kernel, K=K, HID=HID, RANK=RANK)
    out = pl.pallas_call(
        kern,
        out_shape=jax.ShapeDtypeStruct((NOUT, Mp), jnp.float32),
        grid_spec=pltpu.PrefetchScalarGridSpec(
            num_scalar_prefetch=0,
            grid=(Mp // tm,),
            in_specs=[
                pl.BlockSpec((3, 1, tm), lambda i: (0, 0, i)),
                pl.BlockSpec((3, K, tm), lambda i: (0, 0, i)),
                full(slab_w1), full(slab_w2s), full(slab_eb), full(slab_out),
            ],
            out_specs=pl.BlockSpec((NOUT, tm), lambda i: (0, i)),
        ),
        compiler_params=pltpu.CompilerParams(dimension_semantics=("parallel",)),
    )(pts_p, nbr_p, slab_w1, slab_w2s, slab_eb, slab_out)

    out = out[:, :M]                               # drop padded rows
    return jnp.transpose(out, (1, 0)).reshape(B, N, NOUT)


# ------------------------- pure-JAX reference -------------------------------
def reference(pts, nbr_pts, params):
    (w1, b1, g1, be1, w2, b2, wo, bo, go, beo) = params
    ps = pts[:, :, None, :]
    r_mean = jnp.mean(nbr_pts, axis=-2, keepdims=True)
    l1, l2, l3 = r_mean - nbr_pts, nbr_pts - ps, ps - r_mean
    l1n = jnp.linalg.norm(l1, axis=-1, keepdims=True)
    l2n = jnp.linalg.norm(l2, axis=-1, keepdims=True)
    l3n = jnp.broadcast_to(jnp.linalg.norm(l3, axis=-1, keepdims=True), l2n.shape)
    t1 = jnp.sum(l1 * l2, -1, keepdims=True) / (l1n * l2n + RI_EPS)
    t2 = jnp.sum(l2 * l3, -1, keepdims=True) / (l2n * l3n + RI_EPS)
    t3 = jnp.sum(l3 * l1, -1, keepdims=True) / (l3n * l1n + RI_EPS)
    feat = jnp.concatenate([l1n, l2n, l3n, t1, t2, t3], axis=-1)
    h = feat @ w1 + b1
    h = jnp.maximum(_layernorm(h, g1, be1), 0.0)
    kern = h @ w2 + b2
    contracted = jnp.max(kern, axis=-2)
    o = contracted @ wo + bo
    return _layernorm(o, go, beo)


if __name__ == "__main__":
    B, N, K = 2, 256, 8
    HID, RANK, N_OUT = 32, 16, 8   # SparseSO3Conv(rank=16, n_out=8, 32)

    key = jax.random.PRNGKey(0)
    k = jax.random.split(key, 10)

    # Deterministic synthetic parameters (weights stored as (in, out)).
    params = (
        0.3 * jax.random.normal(k[0], (6, HID), jnp.float32),          # w1
        0.05 * jax.random.normal(k[1], (1, HID), jnp.float32),         # b1
        1.0 + 0.1 * jax.random.normal(k[2], (1, HID), jnp.float32),    # ln1 gamma
        0.05 * jax.random.normal(k[3], (1, HID), jnp.float32),         # ln1 beta
        0.3 * jax.random.normal(k[4], (HID, RANK), jnp.float32),       # w2
        0.05 * jax.random.normal(k[5], (1, RANK), jnp.float32),        # b2
        0.3 * jax.random.normal(k[6], (RANK, N_OUT), jnp.float32),     # wo
        0.05 * jax.random.normal(k[7], (1, N_OUT), jnp.float32),       # bo
        1.0 + 0.1 * jax.random.normal(k[8], (1, N_OUT), jnp.float32),  # ln_out gamma
        0.05 * jax.random.normal(k[9], (1, N_OUT), jnp.float32),       # ln_out beta
    )

    kp = jax.random.split(jax.random.PRNGKey(1), 2)
    pts = jax.random.normal(kp[0], (B, N, 3), jnp.float32)
    nbr_pts = pts[:, :, None, :] + 0.1 * jax.random.normal(kp[1], (B, N, K, 3), jnp.float32)

    out = sparse_so3_conv(pts, nbr_pts, params, tm=256)
    out = jax.block_until_ready(out)

    ref = reference(pts, nbr_pts, params)
    np.testing.assert_allclose(np.asarray(out), np.asarray(ref), rtol=2e-3, atol=2e-3)

    print("KERNEL_OK")
</pallas_src>

<mosaic_0001>
module attributes {stable_mosaic.version = 11 : i64} {
  func.func @so3_kernel(%arg0: i32, %arg1: memref<3x1x256xf32, #tpu.memory_space<vmem>>, %arg2: memref<3x8x256xf32, #tpu.memory_space<vmem>>, %arg3: memref<256x48xf32, #tpu.memory_space<vmem>>, %arg4: memref<136x256xf32, #tpu.memory_space<vmem>>, %arg5: memref<256x10xf32, #tpu.memory_space<vmem>>, %arg6: memref<8x19xf32, #tpu.memory_space<vmem>>, %arg7: memref<8x256xf32, #tpu.memory_space<vmem>>) attributes {dimension_semantics = [#tpu.dimension_semantics<parallel>], iteration_bounds = array<i64: 2>, scalar_prefetch = 0 : i64, scratch_operands = 0 : i64, tpu.core_type = #tpu.core_type<tc>, window_params = [{transform_indices = @transform_0, window_bounds = array<i64: 3, 1, 256>}, {transform_indices = @transform_1, window_bounds = array<i64: 3, 8, 256>}, {pipeline_mode = #tpu.pipeline_mode<synchronous>, transform_indices = @transform_2, window_bounds = array<i64: 256, 48>}, {pipeline_mode = #tpu.pipeline_mode<synchronous>, transform_indices = @transform_3, window_bounds = array<i64: 136, 256>}, {pipeline_mode = #tpu.pipeline_mode<synchronous>, transform_indices = @transform_4, window_bounds = array<i64: 256, 10>}, {pipeline_mode = #tpu.pipeline_mode<synchronous>, transform_indices = @transform_5, window_bounds = array<i64: 8, 19>}, {transform_indices = @transform_6, window_bounds = array<i64: 8, 256>}]} {
    %c0 = arith.constant 0 : index
    %c0_0 = arith.constant 0 : index
    %c0_1 = arith.constant 0 : index
    %0 = vector.load %arg2[%c0, %c0_0, %c0_1] : memref<3x8x256xf32, #tpu.memory_space<vmem>>, vector<3x8x256xf32>
    %c0_2 = arith.constant 0 : index
    %c0_3 = arith.constant 0 : index
    %c0_4 = arith.constant 0 : index
    %1 = vector.load %arg1[%c0_2, %c0_3, %c0_4] : memref<3x1x256xf32, #tpu.memory_space<vmem>>, vector<3x1x256xf32>
    %2 = vector.extract_strided_slice %0 {offsets = [0, 0, 0], sizes = [1, 8, 256], strides = [1, 1, 1]} : vector<3x8x256xf32> to vector<1x8x256xf32>
    %3 = vector.shape_cast %2 : vector<1x8x256xf32> to vector<8x256xf32>
    %4 = vector.extract_strided_slice %0 {offsets = [1, 0, 0], sizes = [1, 8, 256], strides = [1, 1, 1]} : vector<3x8x256xf32> to vector<1x8x256xf32>
    %5 = vector.shape_cast %4 : vector<1x8x256xf32> to vector<8x256xf32>
    %6 = vector.extract_strided_slice %0 {offsets = [2, 0, 0], sizes = [1, 8, 256], strides = [1, 1, 1]} : vector<3x8x256xf32> to vector<1x8x256xf32>
    %7 = vector.shape_cast %6 : vector<1x8x256xf32> to vector<8x256xf32>
    %8 = vector.extract_strided_slice %1 {offsets = [0, 0, 0], sizes = [1, 1, 256], strides = [1, 1, 1]} : vector<3x1x256xf32> to vector<1x1x256xf32>
    %9 = vector.shape_cast %8 : vector<1x1x256xf32> to vector<1x256xf32>
    %10 = vector.extract_strided_slice %1 {offsets = [1, 0, 0], sizes = [1, 1, 256], strides = [1, 1, 1]} : vector<3x1x256xf32> to vector<1x1x256xf32>
    %11 = vector.shape_cast %10 : vector<1x1x256xf32> to vector<1x256xf32>
    %12 = vector.extract_strided_slice %1 {offsets = [2, 0, 0], sizes = [1, 1, 256], strides = [1, 1, 1]} : vector<3x1x256xf32> to vector<1x1x256xf32>
    %13 = vector.shape_cast %12 : vector<1x1x256xf32> to vector<1x256xf32>
    %cst = arith.constant dense<0.000000e+00> : vector<256xf32>
    %14 = vector.multi_reduction <add>, %3, %cst [0] : vector<8x256xf32> to vector<256xf32>
    %15 = vector.shape_cast %14 : vector<256xf32> to vector<1x256xf32>
    %cst_5 = arith.constant 8.000000e+00 : f32
    %16 = vector.broadcast %cst_5 : f32 to vector<1x256xf32>
    %17 = arith.divf %15, %16 : vector<1x256xf32>
    %cst_6 = arith.constant dense<0.000000e+00> : vector<256xf32>
    %18 = vector.multi_reduction <add>, %5, %cst_6 [0] : vector<8x256xf32> to vector<256xf32>
    %19 = vector.shape_cast %18 : vector<256xf32> to vector<1x256xf32>
    %cst_7 = arith.constant 8.000000e+00 : f32
    %20 = vector.broadcast %cst_7 : f32 to vector<1x256xf32>
    %21 = arith.divf %19, %20 : vector<1x256xf32>
    %cst_8 = arith.constant dense<0.000000e+00> : vector<256xf32>
    %22 = vector.multi_reduction <add>, %7, %cst_8 [0] : vector<8x256xf32> to vector<256xf32>
    %23 = vector.shape_cast %22 : vector<256xf32> to vector<1x256xf32>
    %cst_9 = arith.constant 8.000000e+00 : f32
    %24 = vector.broadcast %cst_9 : f32 to vector<1x256xf32>
    %25 = arith.divf %23, %24 : vector<1x256xf32>
    %26 = vector.broadcast %17 : vector<1x256xf32> to vector<8x256xf32>
    %27 = arith.subf %26, %3 : vector<8x256xf32>
    %28 = vector.broadcast %21 : vector<1x256xf32> to vector<8x256xf32>
    %29 = arith.subf %28, %5 : vector<8x256xf32>
    %30 = vector.broadcast %25 : vector<1x256xf32> to vector<8x256xf32>
    %31 = arith.subf %30, %7 : vector<8x256xf32>
    %32 = vector.broadcast %9 : vector<1x256xf32> to vector<8x256xf32>
    %33 = arith.subf %3, %32 : vector<8x256xf32>
    %34 = vector.broadcast %11 : vector<1x256xf32> to vector<8x256xf32>
    %35 = arith.subf %5, %34 : vector<8x256xf32>
    %36 = vector.broadcast %13 : vector<1x256xf32> to vector<8x256xf32>
    %37 = arith.subf %7, %36 : vector<8x256xf32>
    %38 = arith.subf %9, %17 : vector<1x256xf32>
    %39 = arith.subf %11, %21 : vector<1x256xf32>
    %40 = arith.subf %13, %25 : vector<1x256xf32>
    %41 = arith.mulf %27, %27 : vector<8x256xf32>
    %42 = arith.mulf %29, %29 : vector<8x256xf32>
    %43 = arith.addf %41, %42 : vector<8x256xf32>
    %44 = arith.mulf %31, %31 : vector<8x256xf32>
    %45 = arith.addf %43, %44 : vector<8x256xf32>
    %46 = math.sqrt %45 : vector<8x256xf32>
    %47 = arith.mulf %33, %33 : vector<8x256xf32>
    %48 = arith.mulf %35, %35 : vector<8x256xf32>
    %49 = arith.addf %47, %48 : vector<8x256xf32>
    %50 = arith.mulf %37, %37 : vector<8x256xf32>
    %51 = arith.addf %49, %50 : vector<8x256xf32>
    %52 = math.sqrt %51 : vector<8x256xf32>
    %53 = arith.mulf %38, %38 : vector<1x256xf32>
    %54 = arith.mulf %39, %39 : vector<1x256xf32>
    %55 = arith.addf %53, %54 : vector<1x256xf32>
    %56 = arith.mulf %40, %40 : vector<1x256xf32>
    %57 = arith.addf %55, %56 : vector<1x256xf32>
    %58 = math.sqrt %57 : vector<1x256xf32>
    %59 = arith.mulf %27, %33 : vector<8x256xf32>
    %60 = arith.mulf %29, %35 : vector<8x256xf32>
    %61 = arith.addf %59, %60 : vector<8x256xf32>
    %62 = arith.mulf %31, %37 : vector<8x256xf32>
    %63 = arith.addf %61, %62 : vector<8x256xf32>
    %64 = arith.mulf %46, %52 : vector<8x256xf32>
    %cst_10 = arith.constant 1.000000e-07 : f32
    %65 = vector.broadcast %cst_10 : f32 to vector<8x256xf32>
    %66 = arith.addf %64, %65 : vector<8x256xf32>
    %67 = tpu.reciprocal %66 {approx = true} : vector<8x256xf32> -> vector<8x256xf32>
    %68 = arith.mulf %66, %67 : vector<8x256xf32>
    %cst_11 = arith.constant 2.000000e+00 : f32
    %69 = vector.broadcast %cst_11 : f32 to vector<8x256xf32>
    %70 = arith.subf %69, %68 : vector<8x256xf32>
    %71 = arith.mulf %67, %70 : vector<8x256xf32>
    %72 = arith.mulf %63, %71 : vector<8x256xf32>
    %73 = vector.broadcast %38 : vector<1x256xf32> to vector<8x256xf32>
    %74 = arith.mulf %33, %73 : vector<8x256xf32>
    %75 = vector.broadcast %39 : vector<1x256xf32> to vector<8x256xf32>
    %76 = arith.mulf %35, %75 : vector<8x256xf32>
    %77 = arith.addf %74, %76 : vector<8x256xf32>
    %78 = vector.broadcast %40 : vector<1x256xf32> to vector<8x256xf32>
    %79 = arith.mulf %37, %78 : vector<8x256xf32>
    %80 = arith.addf %77, %79 : vector<8x256xf32>
    %81 = vector.broadcast %58 : vector<1x256xf32> to vector<8x256xf32>
    %82 = arith.mulf %52, %81 : vector<8x256xf32>
    %cst_12 = arith.constant 1.000000e-07 : f32
    %83 = vector.broadcast %cst_12 : f32 to vector<8x256xf32>
    %84 = arith.addf %82, %83 : vector<8x256xf32>
    %85 = tpu.reciprocal %84 {approx = true} : vector<8x256xf32> -> vector<8x256xf32>
    %86 = arith.mulf %84, %85 : vector<8x256xf32>
    %cst_13 = arith.constant 2.000000e+00 : f32
    %87 = vector.broadcast %cst_13 : f32 to vector<8x256xf32>
    %88 = arith.subf %87, %86 : vector<8x256xf32>
    %89 = arith.mulf %85, %88 : vector<8x256xf32>
    %90 = arith.mulf %80, %89 : vector<8x256xf32>
    %91 = vector.broadcast %38 : vector<1x256xf32> to vector<8x256xf32>
    %92 = arith.mulf %91, %27 : vector<8x256xf32>
    %93 = vector.broadcast %39 : vector<1x256xf32> to vector<8x256xf32>
    %94 = arith.mulf %93, %29 : vector<8x256xf32>
    %95 = arith.addf %92, %94 : vector<8x256xf32>
    %96 = vector.broadcast %40 : vector<1x256xf32> to vector<8x256xf32>
    %97 = arith.mulf %96, %31 : vector<8x256xf32>
    %98 = arith.addf %95, %97 : vector<8x256xf32>
    %99 = vector.broadcast %58 : vector<1x256xf32> to vector<8x256xf32>
    %100 = arith.mulf %99, %46 : vector<8x256xf32>
    %cst_14 = arith.constant 1.000000e-07 : f32
    %101 = vector.broadcast %cst_14 : f32 to vector<8x256xf32>
    %102 = arith.addf %100, %101 : vector<8x256xf32>
    %103 = tpu.reciprocal %102 {approx = true} : vector<8x256xf32> -> vector<8x256xf32>
    %104 = arith.mulf %102, %103 : vector<8x256xf32>
    %cst_15 = arith.constant 2.000000e+00 : f32
    %105 = vector.broadcast %cst_15 : f32 to vector<8x256xf32>
    %106 = arith.subf %105, %104 : vector<8x256xf32>
    %107 = arith.mulf %103, %106 : vector<8x256xf32>
    %108 = arith.mulf %98, %107 : vector<8x256xf32>
    %109 = vector.shape_cast %58 : vector<1x256xf32> to vector<1x256xf32>
    %110 = vector.broadcast %109 : vector<1x256xf32> to vector<8x256xf32>
    %111 = tpu.concatenate %46, %52, %110, %72, %90, %108 in 0 : vector<8x256xf32>, vector<8x256xf32>, vector<8x256xf32>, vector<8x256xf32>, vector<8x256xf32>, vector<8x256xf32> -> vector<48x256xf32>
    %c0_16 = arith.constant 0 : index
    %c0_17 = arith.constant 0 : index
    %112 = vector.load %arg3[%c0_16, %c0_17] : memref<256x48xf32, #tpu.memory_space<vmem>>, vector<256x48xf32>
    %c0_18 = arith.constant 0 : index
    %c0_19 = arith.constant 0 : index
    %113 = vector.load %arg4[%c0_18, %c0_19] : memref<136x256xf32, #tpu.memory_space<vmem>>, vector<136x256xf32>
    %114 = vector.extract_strided_slice %113 {offsets = [0, 0], sizes = [128, 256], strides = [1, 1]} : vector<136x256xf32> to vector<128x256xf32>
    %115 = vector.extract_strided_slice %113 {offsets = [128, 0], sizes = [8, 256], strides = [1, 1]} : vector<136x256xf32> to vector<8x256xf32>
    %c0_20 = arith.constant 0 : index
    %c0_21 = arith.constant 0 : index
    %116 = vector.load %arg5[%c0_20, %c0_21] : memref<256x10xf32, #tpu.memory_space<vmem>>, vector<256x10xf32>
    %117 = vector.extract_strided_slice %116 {offsets = [0, 0], sizes = [256, 8], strides = [1, 1]} : vector<256x10xf32> to vector<256x8xf32>
    %118 = vector.extract_strided_slice %116 {offsets = [0, 8], sizes = [256, 1], strides = [1, 1]} : vector<256x10xf32> to vector<256x1xf32>
    %119 = vector.extract_strided_slice %116 {offsets = [0, 9], sizes = [256, 1], strides = [1, 1]} : vector<256x10xf32> to vector<256x1xf32>
    %c0_22 = arith.constant 0 : index
    %c0_23 = arith.constant 0 : index
    %120 = vector.load %arg6[%c0_22, %c0_23] : memref<8x19xf32, #tpu.memory_space<vmem>>, vector<8x19xf32>
    %121 = vector.extract_strided_slice %120 {offsets = [0, 0], sizes = [8, 16], strides = [1, 1]} : vector<8x19xf32> to vector<8x16xf32>
    %122 = vector.extract_strided_slice %120 {offsets = [0, 16], sizes = [8, 1], strides = [1, 1]} : vector<8x19xf32> to vector<8x1xf32>
    %123 = vector.extract_strided_slice %120 {offsets = [0, 17], sizes = [8, 1], strides = [1, 1]} : vector<8x19xf32> to vector<8x1xf32>
    %124 = vector.extract_strided_slice %120 {offsets = [0, 18], sizes = [8, 1], strides = [1, 1]} : vector<8x19xf32> to vector<8x1xf32>
    %cst_24 = arith.constant dense<0.000000e+00> : vector<256x256xf32>
    %125 = tpu.matmul %112, %111, %cst_24 {dimension_numbers = #tpu.dot_dimension_numbers<[1], [0], [0], [1], [0, 0, 1, 1], [], []>} : vector<256x48xf32>, vector<48x256xf32>, vector<256x256xf32> -> vector<256x256xf32>
    %126 = vector.broadcast %118 : vector<256x1xf32> to vector<256x256xf32>
    %127 = arith.addf %125, %126 : vector<256x256xf32>
    %128 = arith.mulf %127, %127 : vector<256x256xf32>
    %cst_25 = arith.constant dense<0.000000e+00> : vector<8x256xf32>
    %129 = tpu.matmul %115, %128, %cst_25 {dimension_numbers = #tpu.dot_dimension_numbers<[1], [0], [0], [1], [0, 0, 1, 1], [], []>} : vector<8x256xf32>, vector<256x256xf32>, vector<8x256xf32> -> vector<8x256xf32>
    %cst_26 = arith.constant 9.99999974E-6 : f32
    %130 = vector.broadcast %cst_26 : f32 to vector<8x256xf32>
    %131 = arith.addf %129, %130 : vector<8x256xf32>
    %132 = math.rsqrt %131 : vector<8x256xf32>
    %cst_27 = arith.constant dense<0.000000e+00> : vector<256x256xf32>
    %133 = tpu.matmul %117, %132, %cst_27 {dimension_numbers = #tpu.dot_dimension_numbers<[1], [0], [0], [1], [0, 0, 1, 1], [], []>} : vector<256x8xf32>, vector<8x256xf32>, vector<256x256xf32> -> vector<256x256xf32>
    %134 = arith.mulf %127, %133 : vector<256x256xf32>
    %135 = vector.broadcast %119 : vector<256x1xf32> to vector<256x256xf32>
    %136 = arith.addf %134, %135 : vector<256x256xf32>
    %cst_28 = arith.constant 0.000000e+00 : f32
    %137 = vector.broadcast %cst_28 : f32 to vector<256x256xf32>
    %138 = arith.maximumf %136, %137 : vector<256x256xf32>
    %cst_29 = arith.constant dense<0.000000e+00> : vector<128x256xf32>
    %139 = tpu.matmul %114, %138, %cst_29 {dimension_numbers = #tpu.dot_dimension_numbers<[1], [0], [0], [1], [0, 0, 1, 1], [], []>} : vector<128x256xf32>, vector<256x256xf32>, vector<128x256xf32> -> vector<128x256xf32>
    %140 = vector.extract_strided_slice %139 {offsets = [0, 0], sizes = [16, 256], strides = [1, 1]} : vector<128x256xf32> to vector<16x256xf32>
    %141 = vector.extract_strided_slice %139 {offsets = [16, 0], sizes = [16, 256], strides = [1, 1]} : vector<128x256xf32> to vector<16x256xf32>
    %142 = arith.maximumf %140, %141 : vector<16x256xf32>
    %143 = vector.extract_strided_slice %139 {offsets = [32, 0], sizes = [16, 256], strides = [1, 1]} : vector<128x256xf32> to vector<16x256xf32>
    %144 = arith.maximumf %142, %143 : vector<16x256xf32>
    %145 = vector.extract_strided_slice %139 {offsets = [48, 0], sizes = [16, 256], strides = [1, 1]} : vector<128x256xf32> to vector<16x256xf32>
    %146 = arith.maximumf %144, %145 : vector<16x256xf32>
    %147 = vector.extract_strided_slice %139 {offsets = [64, 0], sizes = [16, 256], strides = [1, 1]} : vector<128x256xf32> to vector<16x256xf32>
    %148 = arith.maximumf %146, %147 : vector<16x256xf32>
    %149 = vector.extract_strided_slice %139 {offsets = [80, 0], sizes = [16, 256], strides = [1, 1]} : vector<128x256xf32> to vector<16x256xf32>
    %150 = arith.maximumf %148, %149 : vector<16x256xf32>
    %151 = vector.extract_strided_slice %139 {offsets = [96, 0], sizes = [16, 256], strides = [1, 1]} : vector<128x256xf32> to vector<16x256xf32>
    %152 = arith.maximumf %150, %151 : vector<16x256xf32>
    %153 = vector.extract_strided_slice %139 {offsets = [112, 0], sizes = [16, 256], strides = [1, 1]} : vector<128x256xf32> to vector<16x256xf32>
    %154 = arith.maximumf %152, %153 : vector<16x256xf32>
    %cst_30 = arith.constant dense<0.000000e+00> : vector<8x256xf32>
    %155 = tpu.matmul %121, %154, %cst_30 {dimension_numbers = #tpu.dot_dimension_numbers<[1], [0], [0], [1], [0, 0, 1, 1], [], []>} : vector<8x16xf32>, vector<16x256xf32>, vector<8x256xf32> -> vector<8x256xf32>
    %156 = vector.broadcast %122 : vector<8x1xf32> to vector<8x256xf32>
    %157 = arith.addf %155, %156 : vector<8x256xf32>
    %158 = arith.mulf %157, %157 : vector<8x256xf32>
    %cst_31 = arith.constant dense<0.000000e+00> : vector<256xf32>
    %159 = vector.multi_reduction <add>, %158, %cst_31 [0] : vector<8x256xf32> to vector<256xf32>
    %160 = vector.shape_cast %159 : vector<256xf32> to vector<1x256xf32>
    %cst_32 = arith.constant 8.000000e+00 : f32
    %161 = vector.broadcast %cst_32 : f32 to vector<1x256xf32>
    %162 = arith.divf %160, %161 : vector<1x256xf32>
    %cst_33 = arith.constant 9.99999974E-6 : f32
    %163 = vector.broadcast %cst_33 : f32 to vector<1x256xf32>
    %164 = arith.addf %162, %163 : vector<1x256xf32>
    %165 = math.rsqrt %164 : vector<1x256xf32>
    %166 = vector.broadcast %165 : vector<1x256xf32> to vector<8x256xf32>
    %167 = vector.broadcast %123 : vector<8x1xf32> to vector<8x256xf32>
    %168 = arith.mulf %166, %167 : vector<8x256xf32>
    %169 = arith.mulf %157, %168 : vector<8x256xf32>
    %170 = vector.broadcast %124 : vector<8x1xf32> to vector<8x256xf32>
    %171 = arith.addf %169, %170 : vector<8x256xf32>
    %c0_34 = arith.constant 0 : index
    %c0_35 = arith.constant 0 : index
    %172 = vector.load %arg7[%c0_34, %c0_35] : memref<8x256xf32, #tpu.memory_space<vmem>>, vector<8x256xf32>
    tpu.vector_store %arg7[%c0_34, %c0_35], %171 {strides = array<i32>} : memref<8x256xf32, #tpu.memory_space<vmem>>, vector<8x256xf32>,
    return
  }
  func.func @transform_0(%arg0: i32) -> (i32, i32, i32) {
    %c0_i32 = arith.constant 0 : i32
    %c0_i32_0 = arith.constant 0 : i32
    %c0_i32_1 = arith.constant 0 : i32
    return %c0_i32, %c0_i32_0, %arg0 : i32, i32, i32
  }
  func.func @transform_1(%arg0: i32) -> (i32, i32, i32) {
    %c0_i32 = arith.constant 0 : i32
    %c0_i32_0 = arith.constant 0 : i32
    %c0_i32_1 = arith.constant 0 : i32
    return %c0_i32, %c0_i32_0, %arg0 : i32, i32, i32
  }
  func.func @transform_2(%arg0: i32) -> (i32, i32) {
    %c0_i32 = arith.constant 0 : i32
    %c0_i32_0 = arith.constant 0 : i32
    %c0_i32_1 = arith.constant 0 : i32
    return %c0_i32, %c0_i32_0 : i32, i32
  }
  func.func @transform_3(%arg0: i32) -> (i32, i32) {
    %c0_i32 = arith.constant 0 : i32
    %c0_i32_0 = arith.constant 0 : i32
    %c0_i32_1 = arith.constant 0 : i32
    return %c0_i32, %c0_i32_0 : i32, i32
  }
  func.func @transform_4(%arg0: i32) -> (i32, i32) {
    %c0_i32 = arith.constant 0 : i32
    %c0_i32_0 = arith.constant 0 : i32
    %c0_i32_1 = arith.constant 0 : i32
    return %c0_i32, %c0_i32_0 : i32, i32
  }
  func.func @transform_5(%arg0: i32) -> (i32, i32) {
    %c0_i32 = arith.constant 0 : i32
    %c0_i32_0 = arith.constant 0 : i32
    %c0_i32_1 = arith.constant 0 : i32
    return %c0_i32, %c0_i32_0 : i32, i32
  }
  func.func @transform_6(%arg0: i32) -> (i32, i32) {
    %c0_i32 = arith.constant 0 : i32
    %c0_i32_0 = arith.constant 0 : i32
    return %c0_i32, %arg0 : i32, i32
  }
}

</mosaic_0001>

<llo_original>
// kernel: tile.13
$region0: #{tile.13}
  %s0 = inlined_call_operand.vmem [shape: f32[8,32], index: 0, kind: input, shape index: {}]
  %s1 = inlined_call_operand.vmem [shape: f32[256,1], index: 1, kind: output, shape index: {}]
  $region1: #{tile.13} parent=0
    #allocation0 [shape = 'u8[8192]{0}', space=vmem, size = 0x2000, scoped, tag = 'scoped mem for output reshape']
    %s2 = smov 3
    %v3 = vld [vmem:[%s0] ss:$4 sm:%s2]
    %vm4 = vcmask 261120
    %5 = vst.msk [vmem:[#allocation0] ss:$8 sm:$0x3] %vm4, %v3
    %s6 = scalar_lea.vmem %s0, 3
    %s7 = smov 3
    %v8 = vld [vmem:[%s6] ss:$4 sm:%s7]
    %9 = vrot.lane.b32.xlu0 %v8, 96
    %v10 = vpop.permute.xlu0 %9
    %vm11 = vcmask 1048320
    %12 = vst.msk [vmem:[#allocation0] ss:$8 sm:$0x3] %vm11, %v10
    %s13 = scalar_lea.vmem %s0, 2
    %s14 = smov 3
    %v15 = vld [vmem:[%s13] ss:$4 sm:%s14]
    %16 = vrot.lane.b32.xlu0 %v15, 64
    %v17 = vpop.permute.xlu0 %16
    %vm18 = vcmask 785920
    %19 = vst.msk [vmem:[#allocation0] ss:$8 sm:$0x3] %vm18, %v17
    %s20 = scalar_lea.vmem %s0, 1
    %s21 = smov 3
    %v22 = vld [vmem:[%s20] ss:$4 sm:%s21]
    %23 = vrot.lane.b32.xlu0 %v22, 32
    %v24 = vpop.permute.xlu0 %23
    %vm25 = vcmask 523520
    %26 = vst.msk [vmem:[#allocation0] ss:$8 sm:$0x3] %vm25, %v24
    %s28 = sshllo.u32 0, 1
    %v30 = vld [vmem:[#allocation0] sm:%s28]
    %s31 = sshllo.u32 0, 1
    %32 = vst [vmem:[%s1] sm:%s31] %v30
    %s33 = scalar_lea.vmem [#allocation0], 8
    %v34 = vld [vmem:[%s33] sm:%s28]
    %s35 = sshllo.u32 0, 1
    %s36 = scalar_lea.vmem %s1, 1
    %37 = vst [vmem:[%s36] sm:%s35] %v34

// kernel: tile.12
$region0: #{tile.12}
  #allocation0 [shape = 's32[1]{0}', space=sflag, size = 0x4, scoped, tag = 'scoped memory for tile.12']
  %s0 = inlined_call_operand.vmem [shape: f32[32], index: 0, kind: input, shape index: {}]
  %s1 = inlined_call_operand.vmem [shape: f32[8,32], index: 1, kind: output, shape index: {}]
  // Predicated region
  $region2: #{tile.12} parent=0 // pred_check
    _
  $region3: #{tile.12} parent=0 // pred_check_branch
    %3 = sbr.rel (0) target = $region5
  $region4: #{tile.12} parent=0 // pred_region
    _
  $region5: #{tile.12} parent=0 // pred_fallthru
    _
  %v4 = vld [vmem:[%s0] ss:$0 sm:$0xff]
  %5 = vst [vmem:[%s1] sm:$0xff] %v4

// kernel: sparse_so3_conv.1
$region0: #{sparse_so3_conv.1}
  #allocation0 [shape = 'u32[]', space=smem, size = 0x4, offset = 0x4, fixed_abs, tag = 'smem constant byte address 0x4 - core index']
  #allocation1 [shape = 'u32[144,128]{1,0:T(1,128)}', space=vmem, size = 0x12000, scoped, tag = 'internal scratch']
  %s0 = inlined_call_operand.vmem [shape: f32[3,1,512], index: 0, kind: input, shape index: {}]
  %s1 = inlined_call_operand.vmem [shape: f32[3,8,512], index: 1, kind: input, shape index: {}]
  %s2 = inlined_call_operand.vmem [shape: f32[256,48], index: 2, kind: input, shape index: {}]
  %s3 = inlined_call_operand.vmem [shape: f32[136,256], index: 3, kind: input, shape index: {}]
  %s4 = inlined_call_operand.vmem [shape: f32[256,10], index: 4, kind: input, shape index: {}]
  %s5 = inlined_call_operand.vmem [shape: f32[8,19], index: 5, kind: input, shape index: {}]
  %s6 = inlined_call_operand.hbm [shape: f32[8,512], index: 6, kind: output, shape index: {}]
  %s7 = sld [smem:[#allocation0]]
  $region114: #{sparse_so3_conv.1} parent=0
    _
  %s9 = ssub.s32 1, %s7
  %s10 = scalar_select 0, %s9, %s7
  $region1: #{sparse_so3_conv.1} parent=0
    #allocation2 [shape = 'u8[6144]{0}', space=vmem, size = 0x1800, scoped, tag = 'input window, operand 0']
    #allocation3 [shape = 'u8[49152]{0}', space=vmem, size = 0xc000, scoped, tag = 'input window, operand 1']
    #allocation4 [shape = 'u8[16384]{0}', space=vmem, size = 0x4000, scoped, tag = 'output window, operand 0']
    #allocation5 [shape = 's32[2]{0}', space=sflag, size = 0x8, scoped, tag = 'scoped memory for sparse_so3_conv.1']
    %11 = vsyncpa [#allocation5], 0
    %s12 = scalar_lea.sflag [#allocation5], 1
    %13 = vsyncpa %s12, 0
    loop: start=0, step=1, limit=4
    $region2: #{sparse_so3_conv.1} parent=1 // loop_pre_header
      _
    $region3: #{sparse_so3_conv.1} parent=1 // loop_header
      %s15 = sphi 0, %s19
      %p16 = scmp.ge.s32.totalorder %s15, 4
      %s25 = sphi 0, %s27
      %s28 = sphi 0, %s25
      %s29 = sphi 0, %s28
      %s45 = sphi 0, %s29
      %s51 = sphi 0, %s53
      %s54 = sphi 0, %s51
      %s55 = sphi 0, %s54
      %s71 = sphi 0, %s55
      %s75 = sphi 0, %s75
      %s77 = sphi 0, %s75
      %s78 = sphi 0, %s77
      %s92 = sphi 0, %s78
      %s96 = sphi 0, %s96
      %s98 = sphi 0, %s96
      %s99 = sphi 0, %s98
      %s113 = sphi 0, %s99
      %s117 = sphi 0, %s117
      %s119 = sphi 0, %s117
      %s120 = sphi 0, %s119
      %s134 = sphi 0, %s120
      %s138 = sphi 0, %s138
      %s140 = sphi 0, %s138
      %s141 = sphi 0, %s140
      %s155 = sphi 0, %s141
      %s161 = sphi 0, %s163
      %s164 = sphi 0, %s161
      %s165 = sphi 0, %s164
      %s181 = sphi 0, %s165
    $region4: #{sparse_so3_conv.1} parent=1 // loop_header_branch
      %18 = sbr.rel (%p16) target = $region8
    $region5: #{sparse_so3_conv.1} parent=1 // loop_body
      %s20 = ssub.s32 %s15, 1
      %s21 = ssub.s32 %s15, 2
      %s22 = sadd.s32 %s15, 1
      %s23 = ssub.s32 %s15, %s22
      %p24 = scmp.eq.s32.totalorder %s23, 0
      %s26 = sadd.s32 %s25, 1
      %s27 = scalar_select %p24, %s25, %s26
      %p30 = pneg %p24
      %p31 = scmp.eq.s32.totalorder %s15, 1
      %p32 = por %p30, %p31
      %p33 = scmp.ne.s32.totalorder %s25, %s28
      %p34 = scmp.eq.s32.totalorder %s15, 0
      %p35 = por %p33, %p34
      %p36 = scmp.ne.s32.totalorder %s25, %s28
      %p37 = scmp.eq.s32.totalorder %s20, 1
      %p38 = por %p36, %p37
      %p39 = scmp.ne.s32.totalorder %s28, %s29
      %p40 = scmp.eq.s32.totalorder %s20, 0
      %p41 = por %p39, %p40
      %p42 = scmp.ne.s32.totalorder %s28, %s29
      %p43 = scmp.eq.s32.totalorder %s21, 1
      %p44 = por %p42, %p43
      %p46 = scmp.ne.s32.totalorder %s29, %s45
      %p47 = scmp.eq.s32.totalorder %s21, 0
      %p48 = por %p46, %p47
      %s49 = ssub.s32 %s15, %s22
      %p50 = scmp.eq.s32.totalorder %s49, 0
      %s52 = sadd.s32 %s51, 1
      %s53 = scalar_select %p50, %s51, %s52
      %p56 = pneg %p50
      %p57 = scmp.eq.s32.totalorder %s15, 1
      %p58 = por %p56, %p57
      %p59 = scmp.ne.s32.totalorder %s51, %s54
      %p60 = scmp.eq.s32.totalorder %s15, 0
      %p61 = por %p59, %p60
      %p62 = scmp.ne.s32.totalorder %s51, %s54
      %p63 = scmp.eq.s32.totalorder %s20, 1
      %p64 = por %p62, %p63
      %p65 = scmp.ne.s32.totalorder %s54, %s55
      %p66 = scmp.eq.s32.totalorder %s20, 0
      %p67 = por %p65, %p66
      %p68 = scmp.ne.s32.totalorder %s54, %s55
      %p69 = scmp.eq.s32.totalorder %s21, 1
      %p70 = por %p68, %p69
      %p72 = scmp.ne.s32.totalorder %s55, %s71
      %p73 = scmp.eq.s32.totalorder %s21, 0
      %p74 = por %p72, %p73
      %s76 = sadd.s32 %s75, 1
      %p79 = scmp.eq.s32.totalorder %s15, 1
      %p80 = scmp.ne.s32.totalorder %s75, %s77
      %p81 = scmp.eq.s32.totalorder %s15, 0
      %p82 = por %p80, %p81
      %p83 = scmp.ne.s32.totalorder %s75, %s77
      %p84 = scmp.eq.s32.totalorder %s20, 1
      %p85 = por %p83, %p84
      %p86 = scmp.ne.s32.totalorder %s77, %s78
      %p87 = scmp.eq.s32.totalorder %s20, 0
      %p88 = por %p86, %p87
      %p89 = scmp.ne.s32.totalorder %s77, %s78
      %p90 = scmp.eq.s32.totalorder %s21, 1
      %p91 = por %p89, %p90
      %p93 = scmp.ne.s32.totalorder %s78, %s92
      %p94 = scmp.eq.s32.totalorder %s21, 0
      %p95 = por %p93, %p94
      %s97 = sadd.s32 %s96, 1
      %p100 = scmp.eq.s32.totalorder %s15, 1
      %p101 = scmp.ne.s32.totalorder %s96, %s98
      %p102 = scmp.eq.s32.totalorder %s15, 0
      %p103 = por %p101, %p102
      %p104 = scmp.ne.s32.totalorder %s96, %s98
      %p105 = scmp.eq.s32.totalorder %s20, 1
      %p106 = por %p104, %p105
      %p107 = scmp.ne.s32.totalorder %s98, %s99
      %p108 = scmp.eq.s32.totalorder %s20, 0
      %p109 = por %p107, %p108
      %p110 = scmp.ne.s32.totalorder %s98, %s99
      %p111 = scmp.eq.s32.totalorder %s21, 1
      %p112 = por %p110, %p111
      %p114 = scmp.ne.s32.totalorder %s99, %s113
      %p115 = scmp.eq.s32.totalorder %s21, 0
      %p116 = por %p114, %p115
      %s118 = sadd.s32 %s117, 1
      %p121 = scmp.eq.s32.totalorder %s15, 1
      %p122 = scmp.ne.s32.totalorder %s117, %s119
      %p123 = scmp.eq.s32.totalorder %s15, 0
      %p124 = por %p122, %p123
      %p125 = scmp.ne.s32.totalorder %s117, %s119
      %p126 = scmp.eq.s32.totalorder %s20, 1
      %p127 = por %p125, %p126
      %p128 = scmp.ne.s32.totalorder %s119, %s120
      %p129 = scmp.eq.s32.totalorder %s20, 0
      %p130 = por %p128, %p129
      %p131 = scmp.ne.s32.totalorder %s119, %s120
      %p132 = scmp.eq.s32.totalorder %s21, 1
      %p133 = por %p131, %p132
      %p135 = scmp.ne.s32.totalorder %s120, %s134
      %p136 = scmp.eq.s32.totalorder %s21, 0
      %p137 = por %p135, %p136
      %s139 = sadd.s32 %s138, 1
      %p142 = scmp.eq.s32.totalorder %s15, 1
      %p143 = scmp.ne.s32.totalorder %s138, %s140
      %p144 = scmp.eq.s32.totalorder %s15, 0
      %p145 = por %p143, %p144
      %p146 = scmp.ne.s32.totalorder %s138, %s140
      %p147 = scmp.eq.s32.totalorder %s20, 1
      %p148 = por %p146, %p147
      %p149 = scmp.ne.s32.totalorder %s140, %s141
      %p150 = scmp.eq.s32.totalorder %s20, 0
      %p151 = por %p149, %p150
      %p152 = scmp.ne.s32.totalorder %s140, %s141
      %p153 = scmp.eq.s32.totalorder %s21, 1
      %p154 = por %p152, %p153
      %p156 = scmp.ne.s32.totalorder %s141, %s155
      %p157 = scmp.eq.s32.totalorder %s21, 0
      %p158 = por %p156, %p157
      %s159 = ssub.s32 %s15, %s22
      %p160 = scmp.eq.s32.totalorder %s159, 0
      %s162 = sadd.s32 %s161, 1
      %s163 = scalar_select %p160, %s161, %s162
      %p166 = pneg %p160
      %p167 = scmp.eq.s32.totalorder %s15, 1
      %p168 = por %p166, %p167
      %p169 = scmp.ne.s32.totalorder %s161, %s164
      %p170 = scmp.eq.s32.totalorder %s15, 0
      %p171 = por %p169, %p170
      %p172 = scmp.ne.s32.totalorder %s161, %s164
      %p173 = scmp.eq.s32.totalorder %s20, 1
      %p174 = por %p172, %p173
      %p175 = scmp.ne.s32.totalorder %s164, %s165
      %p176 = scmp.eq.s32.totalorder %s20, 0
      %p177 = por %p175, %p176
      %p178 = scmp.ne.s32.totalorder %s164, %s165
      %p179 = scmp.eq.s32.totalorder %s21, 1
      %p180 = por %p178, %p179
      %p182 = scmp.ne.s32.totalorder %s165, %s181
      %p183 = scmp.eq.s32.totalorder %s21, 0
      %p184 = por %p182, %p183
      %p185 = scmp.le.s32.totalorder 1, %s15
      %p186 = scmp.lt.s32.totalorder %s15, 3
      %p187 = pnand %p185, %p186
      %p188 = pneg %p187
      // Predicated region
      $region9: #{sparse_so3_conv.1} parent=5 // pred_check
        _
      $region10: #{sparse_so3_conv.1} parent=5 // pred_check_branch
        %190 = sbr.rel (%p187) target = $region12
      $region11: #{sparse_so3_conv.1} parent=5 // pred_region
        %s191 = ssub.s32 %s15, 1
        // Predicated region
        $region13: #{sparse_so3_conv.1} parent=11 // pred_check
          %p192 = pneg %p88
        $region14: #{sparse_so3_conv.1} parent=11 // pred_check_branch
          %194 = sbr.rel (%p192) target = $region16
        $region15: #{sparse_so3_conv.1} parent=11 // pred_region
          _
        $region16: #{sparse_so3_conv.1} parent=11 // pred_fallthru
          _
        // Predicated region
        $region17: #{sparse_so3_conv.1} parent=11 // pred_check
          %p195 = pneg %p109
        $region18: #{sparse_so3_conv.1} parent=11 // pred_check_branch
          %197 = sbr.rel (%p195) target = $region20
        $region19: #{sparse_so3_conv.1} parent=11 // pred_region
          _
        $region20: #{sparse_so3_conv.1} parent=11 // pred_fallthru
          _
        // Predicated region
        $region21: #{sparse_so3_conv.1} parent=11 // pred_check
          %p198 = pneg %p130
        $region22: #{sparse_so3_conv.1} parent=11 // pred_check_branch
          %200 = sbr.rel (%p198) target = $region24
        $region23: #{sparse_so3_conv.1} parent=11 // pred_region
          _
        $region24: #{sparse_so3_conv.1} parent=11 // pred_fallthru
          _
        // Predicated region
        $region25: #{sparse_so3_conv.1} parent=11 // pred_check
          %p201 = pneg %p151
        $region26: #{sparse_so3_conv.1} parent=11 // pred_check_branch
          %203 = sbr.rel (%p201) target = $region28
        $region27: #{sparse_so3_conv.1} parent=11 // pred_region
          _
        $region28: #{sparse_so3_conv.1} parent=11 // pred_fallthru
          _
      $region12: #{sparse_so3_conv.1} parent=5 // pred_fallthru
        _
      %p204 = scmp.lt.s32.totalorder %s15, 2
      // Predicated region
      $region29: #{sparse_so3_conv.1} parent=5 // pred_check
        %p205 = pneg %p204
      $region30: #{sparse_so3_conv.1} parent=5 // pred_check_branch
        %207 = sbr.rel (%p205) target = $region32
      $region31: #{sparse_so3_conv.1} parent=5 // pred_region
        // Predicated region
        $region33: #{sparse_so3_conv.1} parent=31 // pred_check
          %p208 = pneg %p35
        $region34: #{sparse_so3_conv.1} parent=31 // pred_check_branch
          %210 = sbr.rel (%p208) target = $region36
        $region35: #{sparse_so3_conv.1} parent=31 // pred_region
          %s211 = sand.u32 %s25, 1
          %s212 = sand.u32 %s25, 1
          %s213 = smul.addr %s212, 6
          %s214 = scalar_lea.vmem [#allocation2], %s213
          %s215 = smul.u32 2, %s15
          %s216 = scalar_lea.vmem %s0, %s215
          // Predicated region
          $region37: #{sparse_so3_conv.1} parent=35 // pred_check
            _
          $region38: #{sparse_so3_conv.1} parent=35 // pred_check_branch
            %218 = sbr.rel (0) target = $region40
          $region39: #{sparse_so3_conv.1} parent=35 // pred_region
            // Predicated region
            $region41: #{sparse_so3_conv.1} parent=39 // pred_check
              _
            $region42: #{sparse_so3_conv.1} parent=39 // pred_check_branch
              %220 = sbr.rel target = $region44
            $region43: #{sparse_so3_conv.1} parent=39 // pred_region
              // Predicated region
              $region56: #{sparse_so3_conv.1} parent=43 // pred_check
                _
              $region57: #{sparse_so3_conv.1} parent=43 // pred_check_branch
                %239 = sbr.rel (0) target = $region59
              $region58: #{sparse_so3_conv.1} parent=43 // pred_region
                loop: start=0, step=1, limit=1
                $region60: #{sparse_so3_conv.1} parent=58 // loop_pre_header
                  _
                $region61: #{sparse_so3_conv.1} parent=58 // loop_header
                  %s242 = sphi 0, %s246
                  %p243 = scmp.ge.s32.totalorder %s242, 1
                  %s247 = sphi %s216, %s216
                  %s248 = sphi %s214, %s214
                $region62: #{sparse_so3_conv.1} parent=58 // loop_header_branch
                  %245 = sbr.rel (%p243) target = $region66
                $region63: #{sparse_so3_conv.1} parent=58 // loop_body
                  %v249 = vld [vmem:[%s247] sm:$0x3]
                  %250 = vst [vmem:[%s248] sm:$0x3] %v249
                  %v251 = vld [vmem:[%s247 + $0x4] sm:$0x3]
                  %252 = vst [vmem:[%s248 + $0x2] sm:$0x3] %v251
                  %v253 = vld [vmem:[%s247 + $0x8] sm:$0x3]
                  %254 = vst [vmem:[%s248 + $0x4] sm:$0x3] %v253
                $region64: #{sparse_so3_conv.1} parent=58 // loop_footer
                  %s246 = sadd.s32 1, %s242
                $region65: #{sparse_so3_conv.1} parent=58 // loop_footer_branch
                  %241 = sbr.rel target = $region61
                $region66: #{sparse_so3_conv.1} parent=58 // loop_exit
                  _
              $region59: #{sparse_so3_conv.1} parent=43 // pred_fallthru
                _
            $region44: #{sparse_so3_conv.1} parent=39 // pred_fallthru
              _
            // Predicated region
            $region45: #{sparse_so3_conv.1} parent=39 // pred_check
              _
            $region46: #{sparse_so3_conv.1} parent=39 // pred_check_branch
              %222 = sbr.rel (0) target = $region48
            $region47: #{sparse_so3_conv.1} parent=39 // pred_region
              loop: start=0, step=1, limit=1
              $region49: #{sparse_so3_conv.1} parent=47 // loop_pre_header
                _
              $region50: #{sparse_so3_conv.1} parent=47 // loop_header
                %s225 = sphi 0, %s229
                %p226 = scmp.ge.s32.totalorder %s225, 1
                %s230 = sphi %s216, %s216
                %s231 = sphi %s214, %s214
              $region51: #{sparse_so3_conv.1} parent=47 // loop_header_branch
                %228 = sbr.rel (%p226) target = $region55
              $region52: #{sparse_so3_conv.1} parent=47 // loop_body
                %v232 = vld [vmem:[%s230] sm:$0x3]
                %233 = vst [vmem:[%s231] sm:$0x3] %v232
                %v234 = vld [vmem:[%s230 + $0x4] sm:$0x3]
                %235 = vst [vmem:[%s231 + $0x2] sm:$0x3] %v234
                %v236 = vld [vmem:[%s230 + $0x8] sm:$0x3]
                %237 = vst [vmem:[%s231 + $0x4] sm:$0x3] %v236
              $region53: #{sparse_so3_conv.1} parent=47 // loop_footer
                %s229 = sadd.s32 1, %s225
              $region54: #{sparse_so3_conv.1} parent=47 // loop_footer_branch
                %224 = sbr.rel target = $region50
              $region55: #{sparse_so3_conv.1} parent=47 // loop_exit
                _
            $region48: #{sparse_so3_conv.1} parent=39 // pred_fallthru
              _
          $region40: #{sparse_so3_conv.1} parent=35 // pred_fallthru
            _
          %255 = vnop
        $region36: #{sparse_so3_conv.1} parent=31 // pred_fallthru
          _
        // Predicated region
        $region67: #{sparse_so3_conv.1} parent=31 // pred_check
          %p256 = pneg %p61
        $region68: #{sparse_so3_conv.1} parent=31 // pred_check_branch
          %258 = sbr.rel (%p256) target = $region70
        $region69: #{sparse_so3_conv.1} parent=31 // pred_region
          %s259 = sand.u32 %s51, 1
          %s260 = sand.u32 %s51, 1
          %s261 = smul.addr %s260, 48
          %s262 = scalar_lea.vmem [#allocation3], %s261
          %s263 = smul.u32 2, %s15
          %s264 = smul.addr %s263, 8
          %s265 = scalar_lea.vmem %s1, %s264
          // Predicated region
          $region71: #{sparse_so3_conv.1} parent=69 // pred_check
            _
          $region72: #{sparse_so3_conv.1} parent=69 // pred_check_branch
            %267 = sbr.rel (0) target = $region74
          $region73: #{sparse_so3_conv.1} parent=69 // pred_region
            // Predicated region
            $region75: #{sparse_so3_conv.1} parent=73 // pred_check
              _
            $region76: #{sparse_so3_conv.1} parent=73 // pred_check_branch
              %269 = sbr.rel (0) target = $region78
            $region77: #{sparse_so3_conv.1} parent=73 // pred_region
              loop: start=0, step=1, limit=1
              $region79: #{sparse_so3_conv.1} parent=77 // loop_pre_header
                _
              $region80: #{sparse_so3_conv.1} parent=77 // loop_header
                %s271 = sphi 0, %s275
                %p272 = scmp.ge.s32.totalorder %s271, 1
                %s276 = sphi %s265, %s265
                %s277 = sphi %s262, %s262
              $region81: #{sparse_so3_conv.1} parent=77 // loop_header_branch
                %274 = sbr.rel (%p272) target = $region85
              $region82: #{sparse_so3_conv.1} parent=77 // loop_body
                %v278 = vld [vmem:[%s276] sm:$0xff]
                %279 = vst [vmem:[%s277] sm:$0xff] %v278
                %v280 = vld [vmem:[%s276 + $0x8] sm:$0xff]
                %281 = vst [vmem:[%s277 + $0x8] sm:$0xff] %v280
                %v282 = vld [vmem:[%s276 + $0x20] sm:$0xff]
                %283 = vst [vmem:[%s277 + $0x10] sm:$0xff] %v282
                %v284 = vld [vmem:[%s276 + $0x28] sm:$0xff]
                %285 = vst [vmem:[%s277 + $0x18] sm:$0xff] %v284
                %v286 = vld [vmem:[%s276 + $0x40] sm:$0xff]
                %287 = vst [vmem:[%s277 + $0x20] sm:$0xff] %v286
                %v288 = vld [vmem:[%s276 + $0x48] sm:$0xff]
                %289 = vst [vmem:[%s277 + $0x28] sm:$0xff] %v288
              $region83: #{sparse_so3_conv.1} parent=77 // loop_footer
                %s275 = sadd.s32 1, %s271
              $region84: #{sparse_so3_conv.1} parent=77 // loop_footer_branch
                %270 = sbr.rel target = $region80
              $region85: #{sparse_so3_conv.1} parent=77 // loop_exit
                _
            $region78: #{sparse_so3_conv.1} parent=73 // pred_fallthru
              _
            // Predicated region
            $region86: #{sparse_so3_conv.1} parent=73 // pred_check
              _
            $region87: #{sparse_so3_conv.1} parent=73 // pred_check_branch
              %291 = sbr.rel target = $region89
            $region88: #{sparse_so3_conv.1} parent=73 // pred_region
              _
            $region89: #{sparse_so3_conv.1} parent=73 // pred_fallthru
              _
          $region74: #{sparse_so3_conv.1} parent=69 // pred_fallthru
            _
          %292 = vnop
        $region70: #{sparse_so3_conv.1} parent=31 // pred_fallthru
          _
      $region32: #{sparse_so3_conv.1} parent=5 // pred_fallthru
        _
      %p293 = scmp.le.s32.totalorder 1, %s15
      %p294 = scmp.lt.s32.totalorder %s15, 3
      %p295 = pnand %p293, %p294
      %p296 = pneg %p295
      // Predicated region
      $region90: #{sparse_so3_conv.1} parent=5 // pred_check
        _
      $region91: #{sparse_so3_conv.1} parent=5 // pred_check_branch
        %298 = sbr.rel (%p295) target = $region93
      $region92: #{sparse_so3_conv.1} parent=5 // pred_region
        %s299 = ssub.s32 %s15, 1
        %s300 = sand.u32 %s28, 1
        %s301 = sand.u32 %s28, 1
        %s302 = smul.addr %s301, 6
        %s303 = scalar_lea.vmem [#allocation2], %s302
        // Predicated region
        $region94: #{sparse_so3_conv.1} parent=92 // pred_check
          %p304 = pneg %p41
        $region95: #{sparse_so3_conv.1} parent=92 // pred_check_branch
          %306 = sbr.rel (%p304) target = $region97
        $region96: #{sparse_so3_conv.1} parent=92 // pred_region
          _
        $region97: #{sparse_so3_conv.1} parent=92 // pred_fallthru
          _
        %s307 = sand.u32 %s54, 1
        %s308 = sand.u32 %s54, 1
        %s309 = smul.addr %s308, 48
        %s310 = scalar_lea.vmem [#allocation3], %s309
        // Predicated region
        $region98: #{sparse_so3_conv.1} parent=92 // pred_check
          %p311 = pneg %p67
        $region99: #{sparse_so3_conv.1} parent=92 // pred_check_branch
          %313 = sbr.rel (%p311) target = $region101
        $region100: #{sparse_so3_conv.1} parent=92 // pred_region
          _
        $region101: #{sparse_so3_conv.1} parent=92 // pred_fallthru
          _
        %s314 = sand.u32 %s28, 1
        %s315 = sand.u32 %s28, 1
        %s316 = smul.addr %s315, 6
        %s317 = scalar_lea.vmem [#allocation2], %s316
        %p318 = pneg %p41
        %p319 = pneg %p38
        %s320 = sand.u32 %s54, 1
        %s321 = sand.u32 %s54, 1
        %s322 = smul.addr %s321, 48
        %s323 = scalar_lea.vmem [#allocation3], %s322
        %p324 = pneg %p67
        %p325 = pneg %p64
        %p326 = pneg %p88
        %p327 = pneg %p85
        %p328 = pneg %p109
        %p329 = pneg %p106
        %p330 = pneg %p130
        %p331 = pneg %p127
        %p332 = pneg %p151
        %p333 = pneg %p148
        %p334 = pneg %p177
        %p335 = pneg %p174
        %s336 = sand.u32 %s164, 1
        %s337 = scalar_lea.sflag [#allocation5], %s336
        %s338 = sand.u32 %s164, 1
        %s339 = smul.addr %s338, 16
        %s340 = scalar_lea.vmem [#allocation4], %s339
        %s341 = smul.u32 2, %s20
        %s342 = smul.u32 2, %s20
        %s343 = smul.u32 2, %s20
        %v344 = vld [vmem:[%s310] sm:$0xff]
        %v345 = vld [vmem:[%s310 + $0x8] sm:$0xff]
        %v346 = vld [vmem:[%s310 + $0x10] sm:$0xff]
        %v347 = vld [vmem:[%s310 + $0x18] sm:$0xff]
        %v348 = vld [vmem:[%s310 + $0x20] sm:$0xff]
        %v349 = vld [vmem:[%s310 + $0x28] sm:$0xff]
        %v350 = vld [vmem:[%s303] sm:$0x3]
        %v351 = vld [vmem:[%s303 + $0x2] sm:$0x3]
        %v352 = vld [vmem:[%s303 + $0x4] sm:$0x3]
        %v353 = vrot.slane %v344, 4
        %v354 = vadd.f32 %v344, %v353
        %v355 = vrot.slane %v354, 2
        %v356 = vadd.f32 %v354, %v355
        %v357 = vrot.slane %v356, 1
        %v358 = vadd.f32 %v356, %v357
        %v359 = vrot.slane %v345, 4
        %v360 = vadd.f32 %v345, %v359
        %v361 = vrot.slane %v360, 2
        %v362 = vadd.f32 %v360, %v361
        %v363 = vrot.slane %v362, 1
        %v364 = vadd.f32 %v362, %v363
        %v365 = vrcp.pop 8.0
        %v366 = vmul.f32 %v358, %v365
        %v367 = vmul.f32 %v364, %v365
        %v368 = vrot.slane %v346, 4
        %v369 = vadd.f32 %v346, %v368
        %v370 = vrot.slane %v369, 2
        %v371 = vadd.f32 %v369, %v370
        %v372 = vrot.slane %v371, 1
        %v373 = vadd.f32 %v371, %v372
        %v374 = vrot.slane %v347, 4
        %v375 = vadd.f32 %v347, %v374
        %v376 = vrot.slane %v375, 2
        %v377 = vadd.f32 %v375, %v376
        %v378 = vrot.slane %v377, 1
        %v379 = vadd.f32 %v377, %v378
        %v380 = vmul.f32 %v373, %v365
        %v381 = vmul.f32 %v379, %v365
        %v382 = vrot.slane %v348, 4
        %v383 = vadd.f32 %v348, %v382
        %v384 = vrot.slane %v383, 2
        %v385 = vadd.f32 %v383, %v384
        %v386 = vrot.slane %v385, 1
        %v387 = vadd.f32 %v385, %v386
        %v388 = vrot.slane %v349, 4
        %v389 = vadd.f32 %v349, %v388
        %v390 = vrot.slane %v389, 2
        %v391 = vadd.f32 %v389, %v390
        %v392 = vrot.slane %v391, 1
        %v393 = vadd.f32 %v391, %v392
        %v394 = vmul.f32 %v387, %v365
        %v395 = vmul.f32 %v393, %v365
        %v396 = vsub.f32 %v366, %v344
        %v397 = vsub.f32 %v367, %v345
        %v398 = vsub.f32 %v380, %v346
        %v399 = vsub.f32 %v381, %v347
        %v400 = vsub.f32 %v394, %v348
        %v401 = vsub.f32 %v395, %v349
        %v403 = vlaneseq
        %v404 = vshrl.u32 %v403, 7
        %v405 = vsub.s32 0, %v404
        %v406 = vrot.slane %v350, %v405
        %v407 = vlaneseq
        %v408 = vshrl.u32 %v407, 7
        %v409 = vsub.s32 1, %v408
        %v410 = vrot.slane %v350, %v409
        %v413 = vsub.f32 %v344, %v406
        %v414 = vsub.f32 %v345, %v410
        %v416 = vlaneseq
        %v417 = vshrl.u32 %v416, 7
        %v418 = vsub.s32 0, %v417
        %v419 = vrot.slane %v351, %v418
        %v420 = vlaneseq
        %v421 = vshrl.u32 %v420, 7
        %v422 = vsub.s32 1, %v421
        %v423 = vrot.slane %v351, %v422
        %v426 = vsub.f32 %v346, %v419
        %v427 = vsub.f32 %v347, %v423
        %v429 = vlaneseq
        %v430 = vshrl.u32 %v429, 7
        %v431 = vsub.s32 0, %v430
        %v432 = vrot.slane %v352, %v431
        %v433 = vlaneseq
        %v434 = vshrl.u32 %v433, 7
        %v435 = vsub.s32 1, %v434
        %v436 = vrot.slane %v352, %v435
        %v439 = vsub.f32 %v348, %v432
        %v440 = vsub.f32 %v349, %v436
        %v443 = vcombine.low %v366, %v367
        %v445 = vunpack.c.l.s4 1966171168
        %v446 = vunpack.c.0.s8 %v445
        %v447 = vlaneseq
        %v448 = vshrl.u32 %v447, 7
        %v449 = vsub.s32 %v446, %v448
        %v450 = vrot.slane %v443, %v449
        %v452 = vunpack.c.l.s4 1966171168
        %v453 = vunpack.c.0.s8 %v452
        %v454 = vlaneseq
        %v455 = vshrl.u32 %v454, 7
        %v456 = vsub.s32 %v453, %v455
        %v457 = vrot.slane %v450, %v456
        %v459 = vsub.f32 %v350, %v457
        %v462 = vcombine.low %v380, %v381
        %v464 = vunpack.c.l.s4 1966171168
        %v465 = vunpack.c.0.s8 %v464
        %v466 = vlaneseq
        %v467 = vshrl.u32 %v466, 7
        %v468 = vsub.s32 %v465, %v467
        %v469 = vrot.slane %v462, %v468
        %v471 = vunpack.c.l.s4 1966171168
        %v472 = vunpack.c.0.s8 %v471
        %v473 = vlaneseq
        %v474 = vshrl.u32 %v473, 7
        %v475 = vsub.s32 %v472, %v474
        %v476 = vrot.slane %v469, %v475
        %v478 = vsub.f32 %v351, %v476
        %v481 = vcombine.low %v394, %v395
        %v483 = vunpack.c.l.s4 1966171168
        %v484 = vunpack.c.0.s8 %v483
        %v485 = vlaneseq
        %v486 = vshrl.u32 %v485, 7
        %v487 = vsub.s32 %v484, %v486
        %v488 = vrot.slane %v481, %v487
        %v490 = vunpack.c.l.s4 1966171168
        %v491 = vunpack.c.0.s8 %v490
        %v492 = vlaneseq
        %v493 = vshrl.u32 %v492, 7
        %v494 = vsub.s32 %v491, %v493
        %v495 = vrot.slane %v488, %v494
        %v497 = vsub.f32 %v352, %v495
        %v498 = vmul.f32 %v396, %v396
        %v499 = vmul.f32 %v397, %v397
        %v500 = vmul.f32 %v398, %v398
        %v501 = vmul.f32 %v399, %v399
        %v502 = vadd.f32 %v498, %v500
        %v503 = vadd.f32 %v499, %v501
        %v504 = vmul.f32 %v400, %v400
        %v505 = vmul.f32 %v401, %v401
        %v506 = vadd.f32 %v502, %v504
        %v507 = vadd.f32 %v503, %v505
        %v508 = vrsqrt.pop %v506
        %v509 = vmul.f32 %v506, %v508
        %vm510 = vcmp.eq.f32.partialorder %v506, inf
        %v511 = vsel %vm510, %v506, %v509
        %vm512 = vcmp.eq.f32.partialorder %v506, 0.0
        %v513 = vand.u32 %v506, 2147483648
        %v514 = vsel %vm512, %v513, %v511
        %v515 = vrsqrt.pop %v507
        %v516 = vmul.f32 %v507, %v515
        %vm517 = vcmp.eq.f32.partialorder %v507, inf
        %v518 = vsel %vm517, %v507, %v516
        %vm519 = vcmp.eq.f32.partialorder %v507, 0.0
        %v520 = vand.u32 %v507, 2147483648
        %v521 = vsel %vm519, %v520, %v518
        %v522 = vmul.f32 %v413, %v413
        %v523 = vmul.f32 %v414, %v414
        %v524 = vmul.f32 %v426, %v426
        %v525 = vmul.f32 %v427, %v427
        %v526 = vadd.f32 %v522, %v524
        %v527 = vadd.f32 %v523, %v525
        %v528 = vmul.f32 %v439, %v439
        %v529 = vmul.f32 %v440, %v440
        %v530 = vadd.f32 %v526, %v528
        %v531 = vadd.f32 %v527, %v529
        %v532 = vrsqrt.pop %v530
        %v533 = vmul.f32 %v530, %v532
        %vm534 = vcmp.eq.f32.partialorder %v530, inf
        %v535 = vsel %vm534, %v530, %v533
        %vm536 = vcmp.eq.f32.partialorder %v530, 0.0
        %v537 = vand.u32 %v530, 2147483648
        %v538 = vsel %vm536, %v537, %v535
        %v539 = vrsqrt.pop %v531
        %v540 = vmul.f32 %v531, %v539
        %vm541 = vcmp.eq.f32.partialorder %v531, inf
        %v542 = vsel %vm541, %v531, %v540
        %vm543 = vcmp.eq.f32.partialorder %v531, 0.0
        %v544 = vand.u32 %v531, 2147483648
        %v545 = vsel %vm543, %v544, %v542
        %v546 = vmul.f32 %v459, %v459
        %v547 = vmul.f32 %v478, %v478
        %v548 = vadd.f32 %v546, %v547
        %v549 = vmul.f32 %v497, %v497
        %v550 = vadd.f32 %v548, %v549
        %v551 = vrsqrt.pop %v550
        %v552 = vmul.f32 %v550, %v551
        %vm553 = vcmp.eq.f32.partialorder %v550, inf
        %v554 = vsel %vm553, %v550, %v552
        %vm555 = vcmp.eq.f32.partialorder %v550, 0.0
        %v556 = vand.u32 %v550, 2147483648
        %v557 = vsel %vm555, %v556, %v554
        %v558 = vmul.f32 %v396, %v413
        %v559 = vmul.f32 %v397, %v414
        %v560 = vmul.f32 %v398, %v426
        %v561 = vmul.f32 %v399, %v427
        %v562 = vadd.f32 %v558, %v560
        %v563 = vadd.f32 %v559, %v561
        %v564 = vmul.f32 %v400, %v439
        %v565 = vmul.f32 %v401, %v440
        %v566 = vadd.f32 %v562, %v564
        %v567 = vadd.f32 %v563, %v565
        %v568 = vmul.f32 %v514, %v538
        %v569 = vmul.f32 %v521, %v545
        %v570 = vadd.f32 %v568, 1e-07
        %v571 = vadd.f32 %v569, 1e-07
        %v572 = vrcp.pop %v570
        %v573 = vrcp.pop %v571
        %v574 = vmul.f32 %v570, %v572
        %v575 = vmul.f32 %v571, %v573
        %v576 = vsub.f32 2.0, %v574
        %v577 = vsub.f32 2.0, %v575
        %v578 = vmul.f32 %v572, %v576
        %v579 = vmul.f32 %v573, %v577
        %v580 = vmul.f32 %v566, %v578
        %v581 = vmul.f32 %v567, %v579
        %v583 = vlaneseq
        %v584 = vshrl.u32 %v583, 7
        %v585 = vsub.s32 0, %v584
        %v586 = vrot.slane %v459, %v585
        %v587 = vlaneseq
        %v588 = vshrl.u32 %v587, 7
        %v589 = vsub.s32 1, %v588
        %v590 = vrot.slane %v459, %v589
        %v593 = vmul.f32 %v413, %v586
        %v594 = vmul.f32 %v414, %v590
        %v596 = vlaneseq
        %v597 = vshrl.u32 %v596, 7
        %v598 = vsub.s32 0, %v597
        %v599 = vrot.slane %v478, %v598
        %v600 = vlaneseq
        %v601 = vshrl.u32 %v600, 7
        %v602 = vsub.s32 1, %v601
        %v603 = vrot.slane %v478, %v602
        %v606 = vmul.f32 %v426, %v599
        %v607 = vmul.f32 %v427, %v603
        %v608 = vadd.f32 %v593, %v606
        %v609 = vadd.f32 %v594, %v607
        %v611 = vlaneseq
        %v612 = vshrl.u32 %v611, 7
        %v613 = vsub.s32 0, %v612
        %v614 = vrot.slane %v497, %v613
        %v615 = vlaneseq
        %v616 = vshrl.u32 %v615, 7
        %v617 = vsub.s32 1, %v616
        %v618 = vrot.slane %v497, %v617
        %v621 = vmul.f32 %v439, %v614
        %v622 = vmul.f32 %v440, %v618
        %v623 = vadd.f32 %v608, %v621
        %v624 = vadd.f32 %v609, %v622
        %v626 = vlaneseq
        %v627 = vshrl.u32 %v626, 7
        %v628 = vsub.s32 0, %v627
        %v629 = vrot.slane %v557, %v628
        %v630 = vlaneseq
        %v631 = vshrl.u32 %v630, 7
        %v632 = vsub.s32 1, %v631
        %v633 = vrot.slane %v557, %v632
        %v636 = vmul.f32 %v538, %v629
        %v637 = vmul.f32 %v545, %v633
        %v638 = vadd.f32 %v636, 1e-07
        %v639 = vadd.f32 %v637, 1e-07
        %v640 = vrcp.pop %v638
        %v641 = vrcp.pop %v639
        %v642 = vmul.f32 %v638, %v640
        %v643 = vmul.f32 %v639, %v641
        %v644 = vsub.f32 2.0, %v642
        %v645 = vsub.f32 2.0, %v643
        %v646 = vmul.f32 %v640, %v644
        %v647 = vmul.f32 %v641, %v645
        %v648 = vmul.f32 %v623, %v646
        %v649 = vmul.f32 %v624, %v647
        %v650 = vmul.f32 %v586, %v396
        %v651 = vmul.f32 %v590, %v397
        %v652 = vmul.f32 %v599, %v398
        %v653 = vmul.f32 %v603, %v399
        %v654 = vadd.f32 %v650, %v652
        %v655 = vadd.f32 %v651, %v653
        %v656 = vmul.f32 %v614, %v400
        %v657 = vmul.f32 %v618, %v401
        %v658 = vadd.f32 %v654, %v656
        %v659 = vadd.f32 %v655, %v657
        %v660 = vmul.f32 %v629, %v514
        %v661 = vmul.f32 %v633, %v521
        %v662 = vadd.f32 %v660, 1e-07
        %v663 = vadd.f32 %v661, 1e-07
        %v664 = vrcp.pop %v662
        %v665 = vrcp.pop %v663
        %v666 = vmul.f32 %v662, %v664
        %v667 = vmul.f32 %v663, %v665
        %v668 = vsub.f32 2.0, %v666
        %v669 = vsub.f32 2.0, %v667
        %v670 = vmul.f32 %v664, %v668
        %v671 = vmul.f32 %v665, %v669
        %v672 = vmul.f32 %v658, %v670
        %v673 = vmul.f32 %v659, %v671
        %v674 = vld [vmem:[%s2] sm:$0xff]
        %v675 = vld [vmem:[%s2 + $0x8] sm:$0xff]
        %v676 = vld [vmem:[%s2 + $0x10] sm:$0xff]
        %v677 = vld [vmem:[%s2 + $0x18] sm:$0xff]
        %v678 = vld [vmem:[%s2 + $0x20] sm:$0xff]
        %v679 = vld [vmem:[%s2 + $0x28] sm:$0xff]
        %v680 = vld [vmem:[%s2 + $0x30] sm:$0xff]
        %v681 = vld [vmem:[%s2 + $0x38] sm:$0xff]
        %v682 = vld [vmem:[%s2 + $0x40] sm:$0xff]
        %v683 = vld [vmem:[%s2 + $0x48] sm:$0xff]
        %v684 = vld [vmem:[%s2 + $0x50] sm:$0xff]
        %v685 = vld [vmem:[%s2 + $0x58] sm:$0xff]
        %v686 = vld [vmem:[%s2 + $0x60] sm:$0xff]
        %v687 = vld [vmem:[%s2 + $0x68] sm:$0xff]
        %v688 = vld [vmem:[%s2 + $0x70] sm:$0xff]
        %v689 = vld [vmem:[%s2 + $0x78] sm:$0xff]
        %v690 = vld [vmem:[%s2 + $0x80] sm:$0xff]
        %v691 = vld [vmem:[%s2 + $0x88] sm:$0xff]
        %v692 = vld [vmem:[%s2 + $0x90] sm:$0xff]
        %v693 = vld [vmem:[%s2 + $0x98] sm:$0xff]
        %v694 = vld [vmem:[%s2 + $0xa0] sm:$0xff]
        %v695 = vld [vmem:[%s2 + $0xa8] sm:$0xff]
        %v696 = vld [vmem:[%s2 + $0xb0] sm:$0xff]
        %v697 = vld [vmem:[%s2 + $0xb8] sm:$0xff]
        %v698 = vld [vmem:[%s2 + $0xc0] sm:$0xff]
        %v699 = vld [vmem:[%s2 + $0xc8] sm:$0xff]
        %v700 = vld [vmem:[%s2 + $0xd0] sm:$0xff]
        %v701 = vld [vmem:[%s2 + $0xd8] sm:$0xff]
        %v702 = vld [vmem:[%s2 + $0xe0] sm:$0xff]
        %v703 = vld [vmem:[%s2 + $0xe8] sm:$0xff]
        %v704 = vld [vmem:[%s2 + $0xf0] sm:$0xff]
        %v705 = vld [vmem:[%s2 + $0xf8] sm:$0xff]
        %v706 = vld [vmem:[%s3] sm:$0xff]
        %v707 = vld [vmem:[%s3 + $0x8] sm:$0xff]
        %v708 = vld [vmem:[%s3 + $0x10] sm:$0xff]
        %v709 = vld [vmem:[%s3 + $0x18] sm:$0xff]
        %v710 = vld [vmem:[%s3 + $0x20] sm:$0xff]
        %v711 = vld [vmem:[%s3 + $0x28] sm:$0xff]
        %v712 = vld [vmem:[%s3 + $0x30] sm:$0xff]
        %v713 = vld [vmem:[%s3 + $0x38] sm:$0xff]
        %v714 = vld [vmem:[%s3 + $0x40] sm:$0xff]
        %v715 = vld [vmem:[%s3 + $0x48] sm:$0xff]
        %v716 = vld [vmem:[%s3 + $0x50] sm:$0xff]
        %v717 = vld [vmem:[%s3 + $0x58] sm:$0xff]
        %v718 = vld [vmem:[%s3 + $0x60] sm:$0xff]
        %v719 = vld [vmem:[%s3 + $0x68] sm:$0xff]
        %v720 = vld [vmem:[%s3 + $0x70] sm:$0xff]
        %v721 = vld [vmem:[%s3 + $0x78] sm:$0xff]
        %v722 = vld [vmem:[%s3 + $0x80] sm:$0xff]
        %v723 = vld [vmem:[%s3 + $0x88] sm:$0xff]
        %v724 = vld [vmem:[%s3 + $0x90] sm:$0xff]
        %v725 = vld [vmem:[%s3 + $0x98] sm:$0xff]
        %v726 = vld [vmem:[%s3 + $0xa0] sm:$0xff]
        %v727 = vld [vmem:[%s3 + $0xa8] sm:$0xff]
        %v728 = vld [vmem:[%s3 + $0xb0] sm:$0xff]
        %v729 = vld [vmem:[%s3 + $0xb8] sm:$0xff]
        %v730 = vld [vmem:[%s3 + $0xc0] sm:$0xff]
        %v731 = vld [vmem:[%s3 + $0xc8] sm:$0xff]
        %v732 = vld [vmem:[%s3 + $0xd0] sm:$0xff]
        %v733 = vld [vmem:[%s3 + $0xd8] sm:$0xff]
        %v734 = vld [vmem:[%s3 + $0xe0] sm:$0xff]
        %v735 = vld [vmem:[%s3 + $0xe8] sm:$0xff]
        %v736 = vld [vmem:[%s3 + $0xf0] sm:$0xff]
        %v737 = vld [vmem:[%s3 + $0xf8] sm:$0xff]
        %v738 = vld [vmem:[%s3 + $0x100] sm:$0xff]
        %v739 = vld [vmem:[%s3 + $0x108] sm:$0xff]
        %v740 = vld [vmem:[%s4] sm:$0xff]
        %v741 = vld [vmem:[%s4 + $0x8] sm:$0xff]
        %v742 = vld [vmem:[%s4 + $0x10] sm:$0xff]
        %v743 = vld [vmem:[%s4 + $0x18] sm:$0xff]
        %v744 = vld [vmem:[%s4 + $0x20] sm:$0xff]
        %v745 = vld [vmem:[%s4 + $0x28] sm:$0xff]
        %v746 = vld [vmem:[%s4 + $0x30] sm:$0xff]
        %v747 = vld [vmem:[%s4 + $0x38] sm:$0xff]
        %v748 = vld [vmem:[%s4 + $0x40] sm:$0xff]
        %v749 = vld [vmem:[%s4 + $0x48] sm:$0xff]
        %v750 = vld [vmem:[%s4 + $0x50] sm:$0xff]
        %v751 = vld [vmem:[%s4 + $0x58] sm:$0xff]
        %v752 = vld [vmem:[%s4 + $0x60] sm:$0xff]
        %v753 = vld [vmem:[%s4 + $0x68] sm:$0xff]
        %v754 = vld [vmem:[%s4 + $0x70] sm:$0xff]
        %v755 = vld [vmem:[%s4 + $0x78] sm:$0xff]
        %v756 = vld [vmem:[%s4 + $0x80] sm:$0xff]
        %v757 = vld [vmem:[%s4 + $0x88] sm:$0xff]
        %v758 = vld [vmem:[%s4 + $0x90] sm:$0xff]
        %v759 = vld [vmem:[%s4 + $0x98] sm:$0xff]
        %v760 = vld [vmem:[%s4 + $0xa0] sm:$0xff]
        %v761 = vld [vmem:[%s4 + $0xa8] sm:$0xff]
        %v762 = vld [vmem:[%s4 + $0xb0] sm:$0xff]
        %v763 = vld [vmem:[%s4 + $0xb8] sm:$0xff]
        %v764 = vld [vmem:[%s4 + $0xc0] sm:$0xff]
        %v765 = vld [vmem:[%s4 + $0xc8] sm:$0xff]
        %v766 = vld [vmem:[%s4 + $0xd0] sm:$0xff]
        %v767 = vld [vmem:[%s4 + $0xd8] sm:$0xff]
        %v768 = vld [vmem:[%s4 + $0xe0] sm:$0xff]
        %v769 = vld [vmem:[%s4 + $0xe8] sm:$0xff]
        %v770 = vld [vmem:[%s4 + $0xf0] sm:$0xff]
        %v771 = vld [vmem:[%s4 + $0xf8] sm:$0xff]
        %v772 = vld [vmem:[%s5] sm:$0xff]
        %774 = vset.pattern.permute.xlu0 8
        %775 = vperm.xlu0 %774, %v740
        %v776 = vpop.permute.xlu0 %775
        %779 = vset.pattern.permute.xlu0 8
        %780 = vperm.xlu0 %779, %v741
        %v781 = vpop.permute.xlu0 %780
        %784 = vset.pattern.permute.xlu0 8
        %785 = vperm.xlu0 %784, %v742
        %v786 = vpop.permute.xlu0 %785
        %789 = vset.pattern.permute.xlu0 8
        %790 = vperm.xlu0 %789, %v743
        %v791 = vpop.permute.xlu0 %790
        %794 = vset.pattern.permute.xlu0 8
        %795 = vperm.xlu0 %794, %v744
        %v796 = vpop.permute.xlu0 %795
        %799 = vset.pattern.permute.xlu0 8
        %800 = vperm.xlu0 %799, %v745
        %v801 = vpop.permute.xlu0 %800
        %804 = vset.pattern.permute.xlu0 8
        %805 = vperm.xlu0 %804, %v746
        %v806 = vpop.permute.xlu0 %805
        %809 = vset.pattern.permute.xlu0 8
        %810 = vperm.xlu0 %809, %v747
        %v811 = vpop.permute.xlu0 %810
        %814 = vset.pattern.permute.xlu0 8
        %815 = vperm.xlu0 %814, %v748
        %v816 = vpop.permute.xlu0 %815
        %819 = vset.pattern.permute.xlu0 8
        %820 = vperm.xlu0 %819, %v749
        %v821 = vpop.permute.xlu0 %820
        %824 = vset.pattern.permute.xlu0 8
        %825 = vperm.xlu0 %824, %v750
        %v826 = vpop.permute.xlu0 %825
        %829 = vset.pattern.permute.xlu0 8
        %830 = vperm.xlu0 %829, %v751
        %v831 = vpop.permute.xlu0 %830
        %834 = vset.pattern.permute.xlu0 8
        %835 = vperm.xlu0 %834, %v752
        %v836 = vpop.permute.xlu0 %835
        %839 = vset.pattern.permute.xlu0 8
        %840 = vperm.xlu0 %839, %v753
        %v841 = vpop.permute.xlu0 %840
        %844 = vset.pattern.permute.xlu0 8
        %845 = vperm.xlu0 %844, %v754
        %v846 = vpop.permute.xlu0 %845
        %849 = vset.pattern.permute.xlu0 8
        %850 = vperm.xlu0 %849, %v755
        %v851 = vpop.permute.xlu0 %850
        %854 = vset.pattern.permute.xlu0 8
        %855 = vperm.xlu0 %854, %v756
        %v856 = vpop.permute.xlu0 %855
        %859 = vset.pattern.permute.xlu0 8
        %860 = vperm.xlu0 %859, %v757
        %v861 = vpop.permute.xlu0 %860
        %864 = vset.pattern.permute.xlu0 8
        %865 = vperm.xlu0 %864, %v758
        %v866 = vpop.permute.xlu0 %865
        %869 = vset.pattern.permute.xlu0 8
        %870 = vperm.xlu0 %869, %v759
        %v871 = vpop.permute.xlu0 %870
        %874 = vset.pattern.permute.xlu0 8
        %875 = vperm.xlu0 %874, %v760
        %v876 = vpop.permute.xlu0 %875
        %879 = vset.pattern.permute.xlu0 8
        %880 = vperm.xlu0 %879, %v761
        %v881 = vpop.permute.xlu0 %880
        %884 = vset.pattern.permute.xlu0 8
        %885 = vperm.xlu0 %884, %v762
        %v886 = vpop.permute.xlu0 %885
        %889 = vset.pattern.permute.xlu0 8
        %890 = vperm.xlu0 %889, %v763
        %v891 = vpop.permute.xlu0 %890
        %894 = vset.pattern.permute.xlu0 8
        %895 = vperm.xlu0 %894, %v764
        %v896 = vpop.permute.xlu0 %895
        %899 = vset.pattern.permute.xlu0 8
        %900 = vperm.xlu0 %899, %v765
        %v901 = vpop.permute.xlu0 %900
        %904 = vset.pattern.permute.xlu0 8
        %905 = vperm.xlu0 %904, %v766
        %v906 = vpop.permute.xlu0 %905
        %909 = vset.pattern.permute.xlu0 8
        %910 = vperm.xlu0 %909, %v767
        %v911 = vpop.permute.xlu0 %910
        %914 = vset.pattern.permute.xlu0 8
        %915 = vperm.xlu0 %914, %v768
        %v916 = vpop.permute.xlu0 %915
        %919 = vset.pattern.permute.xlu0 8
        %920 = vperm.xlu0 %919, %v769
        %v921 = vpop.permute.xlu0 %920
        %924 = vset.pattern.permute.xlu0 8
        %925 = vperm.xlu0 %924, %v770
        %v926 = vpop.permute.xlu0 %925
        %929 = vset.pattern.permute.xlu0 8
        %930 = vperm.xlu0 %929, %v771
        %v931 = vpop.permute.xlu0 %930
        %vm933 = vcmask 392192
        %v935 = vsel %vm933, %v674, 0
        %v938 = vsel %vm933, %v675, 0
        %v941 = vsel %vm933, %v676, 0
        %v944 = vsel %vm933, %v677, 0
        %v947 = vsel %vm933, %v678, 0
        %v950 = vsel %vm933, %v679, 0
        %v953 = vsel %vm933, %v680, 0
        %v956 = vsel %vm933, %v681, 0
        %v959 = vsel %vm933, %v682, 0
        %v962 = vsel %vm933, %v683, 0
        %v965 = vsel %vm933, %v684, 0
        %v968 = vsel %vm933, %v685, 0
        %v971 = vsel %vm933, %v686, 0
        %v974 = vsel %vm933, %v687, 0
        %v977 = vsel %vm933, %v688, 0
        %v980 = vsel %vm933, %v689, 0
        %v983 = vsel %vm933, %v690, 0
        %v986 = vsel %vm933, %v691, 0
        %v989 = vsel %vm933, %v692, 0
        %v992 = vsel %vm933, %v693, 0
        %v995 = vsel %vm933, %v694, 0
        %v998 = vsel %vm933, %v695, 0
        %v1001 = vsel %vm933, %v696, 0
        %v1004 = vsel %vm933, %v697, 0
        %v1007 = vsel %vm933, %v698, 0
        %v1010 = vsel %vm933, %v699, 0
        %v1013 = vsel %vm933, %v700, 0
        %v1016 = vsel %vm933, %v701, 0
        %v1019 = vsel %vm933, %v702, 0
        %v1022 = vsel %vm933, %v703, 0
        %v1025 = vsel %vm933, %v704, 0
        %v1028 = vsel %vm933, %v705, 0
        %1030 = vmatprep.subr.mxu0 %v521
        %1031 = vmatpush1.msra.mxu0 %v514
        %1032 = vmatprep.subr.mxu0 %v545
        %1033 = vmatpush1.msra.mxu0 %v538
        %1034 = vmatprep.subr.mxu0 %v633
        %1035 = vmatpush1.msra.mxu0 %v629
        %1036 = vmatprep.subr.mxu0 %v581
        %1037 = vmatpush1.msra.mxu0 %v580
        %1038 = vmatprep.subr.mxu0 %v649
        %1039 = vmatpush1.msra.mxu0 %v648
        %1040 = vmatprep.subr.mxu0 %v673
        %1041 = vmatpush1.msra.mxu0 %v672
        %1042 = vmatprep.subr.mxu0 0.0
        %1043 = vmatpush1.msra.mxu0 0.0
        %1044 = vmatprep.subr.mxu0 0.0
        %1045 = vmatpush1.msra.mxu0 0.0
        %1046 = vmatprep.subr.mxu0 0.0
        %1047 = vmatpush1.msra.mxu0 0.0
        %1048 = vmatprep.subr.mxu0 0.0
        %1049 = vmatpush1.msra.mxu0 0.0
        %1050 = vmatprep.subr.mxu0 0.0
        %1051 = vmatpush1.msra.mxu0 0.0
        %1052 = vmatprep.subr.mxu0 0.0
        %1053 = vmatpush1.msra.mxu0 0.0
        %1054 = vmatprep.subr.mxu0 0.0
        %1055 = vmatpush1.msra.mxu0 0.0
        %1056 = vmatprep.subr.mxu0 0.0
        %1057 = vmatpush1.msra.mxu0 0.0
        %1058 = vmatprep.subr.mxu0 0.0
        %1059 = vmatpush1.msra.mxu0 0.0
        %1060 = vmatprep.subr.mxu0 0.0
        %1061 = vmatpush1.msra.mxu0 0.0
        %1062 = vmatprep.subr.mxu0 0.0
        %1063 = vmatpush1.msra.mxu0 0.0
        %1064 = vmatprep.subr.mxu0 0.0
        %1065 = vmatpush1.msra.mxu0 0.0
        %1066 = vmatprep.subr.mxu0 0.0
        %1067 = vmatpush1.msra.mxu0 0.0
        %1068 = vmatprep.subr.mxu0 0.0
        %1069 = vmatpush1.msra.mxu0 0.0
        %1070 = vmatprep.subr.mxu0 0.0
        %1071 = vmatpush1.msra.mxu0 0.0
        %1072 = vmatprep.subr.mxu0 0.0
        %1073 = vmatpush1.msra.mxu0 0.0
        %1074 = vmatprep.subr.mxu0 0.0
        %1075 = vmatpush1.msra.mxu0 0.0
        %1076 = vmatprep.subr.mxu0 0.0
        %1077 = vmatpush1.msra.mxu0 0.0
        %1078 = vmatprep.subr.mxu0 0.0
        %1079 = vmatpush1.msra.mxu0 0.0
        %1080 = vmatprep.subr.mxu0 0.0
        %1081 = vmatpush1.msra.mxu0 0.0
        %1082 = vmatprep.subr.mxu0 0.0
        %1083 = vmatpush1.msra.mxu0 0.0
        %1084 = vmatprep.subr.mxu0 0.0
        %1085 = vmatpush1.msra.mxu0 0.0
        %1086 = vmatprep.subr.mxu0 0.0
        %1087 = vmatpush1.msra.mxu0 0.0
        %1088 = vmatprep.subr.mxu0 0.0
        %1089 = vmatpush1.msra.mxu0 0.0
        %1090 = vmatprep.subr.mxu0 0.0
        %1091 = vmatpush1.msra.mxu0 0.0
        %1092 = vmatprep.subr.mxu0 0.0
        %1093 = vmatpush1.msra.mxu0 0.0
        %1094 = vmatprep.mubr.f32.mxu0 0.0
        %1095 = vmatmul.mubr.f32.gmra.mrb[0].mxu0 %v935
        %v1096 = vpop.f32.mrb[0].mxu0
        %v1097 = vadd.f32 %v776, %v1096
        %v1098 = vpop.f32.mrb[0].mxu0
        %v1099 = vadd.f32 %v776, %v1098
        %1100 = vmatprep.mubr.f32.mxu0 0.0
        %1101 = vmatmul.mubr.f32.gmra.mrb[0].mxu0 %v938
        %v1102 = vpop.f32.mrb[0].mxu0
        %v1103 = vadd.f32 %v781, %v1102
        %v1104 = vpop.f32.mrb[0].mxu0
        %v1105 = vadd.f32 %v781, %v1104
        %1106 = vmatprep.mubr.f32.mxu0 0.0
        %1107 = vmatmul.mubr.f32.gmra.mrb[0].mxu0 %v941
        %v1108 = vpop.f32.mrb[0].mxu0
        %v1109 = vadd.f32 %v786, %v1108
        %v1110 = vpop.f32.mrb[0].mxu0
        %v1111 = vadd.f32 %v786, %v1110
        %1112 = vmatprep.mubr.f32.mxu0 0.0
        %1113 = vmatmul.mubr.f32.gmra.mrb[0].mxu0 %v944
        %v1114 = vpop.f32.mrb[0].mxu0
        %v1115 = vadd.f32 %v791, %v1114
        %v1116 = vpop.f32.mrb[0].mxu0
        %v1117 = vadd.f32 %v791, %v1116
        %1118 = vmatprep.mubr.f32.mxu0 0.0
        %1119 = vmatmul.mubr.f32.gmra.mrb[0].mxu0 %v947
        %v1120 = vpop.f32.mrb[0].mxu0
        %v1121 = vadd.f32 %v796, %v1120
        %v1122 = vpop.f32.mrb[0].mxu0
        %v1123 = vadd.f32 %v796, %v1122
        %1124 = vmatprep.mubr.f32.mxu0 0.0
        %1125 = vmatmul.mubr.f32.gmra.mrb[0].mxu0 %v950
        %v1126 = vpop.f32.mrb[0].mxu0
        %v1127 = vadd.f32 %v801, %v1126
        %v1128 = vpop.f32.mrb[0].mxu0
        %v1129 = vadd.f32 %v801, %v1128
        %1130 = vmatprep.mubr.f32.mxu0 0.0
        %1131 = vmatmul.mubr.f32.gmra.mrb[0].mxu0 %v953
        %v1132 = vpop.f32.mrb[0].mxu0
        %v1133 = vadd.f32 %v806, %v1132
        %v1134 = vpop.f32.mrb[0].mxu0
        %v1135 = vadd.f32 %v806, %v1134
        %1136 = vmatprep.mubr.f32.mxu0 0.0
        %1137 = vmatmul.mubr.f32.gmra.mrb[0].mxu0 %v956
        %v1138 = vpop.f32.mrb[0].mxu0
        %v1139 = vadd.f32 %v811, %v1138
        %v1140 = vpop.f32.mrb[0].mxu0
        %v1141 = vadd.f32 %v811, %v1140
        %1142 = vmatprep.mubr.f32.mxu0 0.0
        %1143 = vmatmul.mubr.f32.gmra.mrb[0].mxu0 %v959
        %v1144 = vpop.f32.mrb[0].mxu0
        %v1145 = vadd.f32 %v816, %v1144
        %v1146 = vpop.f32.mrb[0].mxu0
        %v1147 = vadd.f32 %v816, %v1146
        %1148 = vmatprep.mubr.f32.mxu0 0.0
        %1149 = vmatmul.mubr.f32.gmra.mrb[0].mxu0 %v962
        %v1150 = vpop.f32.mrb[0].mxu0
        %v1151 = vadd.f32 %v821, %v1150
        %v1152 = vpop.f32.mrb[0].mxu0
        %v1153 = vadd.f32 %v821, %v1152
        %1154 = vmatprep.mubr.f32.mxu0 0.0
        %1155 = vmatmul.mubr.f32.gmra.mrb[0].mxu0 %v965
        %v1156 = vpop.f32.mrb[0].mxu0
        %v1157 = vadd.f32 %v826, %v1156
        %v1158 = vpop.f32.mrb[0].mxu0
        %v1159 = vadd.f32 %v826, %v1158
        %1160 = vmatprep.mubr.f32.mxu0 0.0
        %1161 = vmatmul.mubr.f32.gmra.mrb[0].mxu0 %v968
        %v1162 = vpop.f32.mrb[0].mxu0
        %v1163 = vadd.f32 %v831, %v1162
        %v1164 = vpop.f32.mrb[0].mxu0
        %v1165 = vadd.f32 %v831, %v1164
        %1166 = vmatprep.mubr.f32.mxu0 0.0
        %1167 = vmatmul.mubr.f32.gmra.mrb[0].mxu0 %v971
        %v1168 = vpop.f32.mrb[0].mxu0
        %v1169 = vadd.f32 %v836, %v1168
        %v1170 = vpop.f32.mrb[0].mxu0
        %v1171 = vadd.f32 %v836, %v1170
        %1172 = vmatprep.mubr.f32.mxu0 0.0
        %1173 = vmatmul.mubr.f32.gmra.mrb[0].mxu0 %v974
        %v1174 = vpop.f32.mrb[0].mxu0
        %v1175 = vadd.f32 %v841, %v1174
        %v1176 = vpop.f32.mrb[0].mxu0
        %v1177 = vadd.f32 %v841, %v1176
        %1178 = vmatprep.mubr.f32.mxu0 0.0
        %1179 = vmatmul.mubr.f32.gmra.mrb[0].mxu0 %v977
        %v1180 = vpop.f32.mrb[0].mxu0
        %v1181 = vadd.f32 %v846, %v1180
        %v1182 = vpop.f32.mrb[0].mxu0
        %v1183 = vadd.f32 %v846, %v1182
        %1184 = vmatprep.mubr.f32.mxu0 0.0
        %1185 = vmatmul.mubr.f32.gmra.mrb[0].mxu0 %v980
        %v1186 = vpop.f32.mrb[0].mxu0
        %v1187 = vadd.f32 %v851, %v1186
        %v1188 = vpop.f32.mrb[0].mxu0
        %v1189 = vadd.f32 %v851, %v1188
        %1190 = vmatprep.mubr.f32.mxu0 0.0
        %1191 = vmatmul.mubr.f32.gmra.mrb[0].mxu0 %v983
        %v1192 = vpop.f32.mrb[0].mxu0
        %v1193 = vadd.f32 %v856, %v1192
        %v1194 = vpop.f32.mrb[0].mxu0
        %v1195 = vadd.f32 %v856, %v1194
        %1196 = vmatprep.mubr.f32.mxu0 0.0
        %1197 = vmatmul.mubr.f32.gmra.mrb[0].mxu0 %v986
        %v1198 = vpop.f32.mrb[0].mxu0
        %v1199 = vadd.f32 %v861, %v1198
        %v1200 = vpop.f32.mrb[0].mxu0
        %v1201 = vadd.f32 %v861, %v1200
        %1202 = vmatprep.mubr.f32.mxu0 0.0
        %1203 = vmatmul.mubr.f32.gmra.mrb[0].mxu0 %v989
        %v1204 = vpop.f32.mrb[0].mxu0
        %v1205 = vadd.f32 %v866, %v1204
        %v1206 = vpop.f32.mrb[0].mxu0
        %v1207 = vadd.f32 %v866, %v1206
        %1208 = vmatprep.mubr.f32.mxu0 0.0
        %1209 = vmatmul.mubr.f32.gmra.mrb[0].mxu0 %v992
        %v1210 = vpop.f32.mrb[0].mxu0
        %v1211 = vadd.f32 %v871, %v1210
        %v1212 = vpop.f32.mrb[0].mxu0
        %v1213 = vadd.f32 %v871, %v1212
        %1214 = vmatprep.mubr.f32.mxu0 0.0
        %1215 = vmatmul.mubr.f32.gmra.mrb[0].mxu0 %v995
        %v1216 = vpop.f32.mrb[0].mxu0
        %v1217 = vadd.f32 %v876, %v1216
        %v1218 = vpop.f32.mrb[0].mxu0
        %v1219 = vadd.f32 %v876, %v1218
        %1220 = vmatprep.mubr.f32.mxu0 0.0
        %1221 = vmatmul.mubr.f32.gmra.mrb[0].mxu0 %v998
        %v1222 = vpop.f32.mrb[0].mxu0
        %v1223 = vadd.f32 %v881, %v1222
        %v1224 = vpop.f32.mrb[0].mxu0
        %v1225 = vadd.f32 %v881, %v1224
        %1226 = vmatprep.mubr.f32.mxu0 0.0
        %1227 = vmatmul.mubr.f32.gmra.mrb[0].mxu0 %v1001
        %v1228 = vpop.f32.mrb[0].mxu0
        %v1229 = vadd.f32 %v886, %v1228
        %v1230 = vpop.f32.mrb[0].mxu0
        %v1231 = vadd.f32 %v886, %v1230
        %1232 = vmatprep.mubr.f32.mxu0 0.0
        %1233 = vmatmul.mubr.f32.gmra.mrb[0].mxu0 %v1004
        %v1234 = vpop.f32.mrb[0].mxu0
        %v1235 = vadd.f32 %v891, %v1234
        %v1236 = vpop.f32.mrb[0].mxu0
        %v1237 = vadd.f32 %v891, %v1236
        %1238 = vmatprep.mubr.f32.mxu0 0.0
        %1239 = vmatmul.mubr.f32.gmra.mrb[0].mxu0 %v1007
        %v1240 = vpop.f32.mrb[0].mxu0
        %v1241 = vadd.f32 %v896, %v1240
        %v1242 = vpop.f32.mrb[0].mxu0
        %v1243 = vadd.f32 %v896, %v1242
        %1244 = vmatprep.mubr.f32.mxu0 0.0
        %1245 = vmatmul.mubr.f32.gmra.mrb[0].mxu0 %v1010
        %v1246 = vpop.f32.mrb[0].mxu0
        %v1247 = vadd.f32 %v901, %v1246
        %v1248 = vpop.f32.mrb[0].mxu0
        %v1249 = vadd.f32 %v901, %v1248
        %1250 = vmatprep.mubr.f32.mxu0 0.0
        %1251 = vmatmul.mubr.f32.gmra.mrb[0].mxu0 %v1013
        %v1252 = vpop.f32.mrb[0].mxu0
        %v1253 = vadd.f32 %v906, %v1252
        %v1254 = vpop.f32.mrb[0].mxu0
        %v1255 = vadd.f32 %v906, %v1254
        %1256 = vmatprep.mubr.f32.mxu0 0.0
        %1257 = vmatmul.mubr.f32.gmra.mrb[0].mxu0 %v1016
        %v1258 = vpop.f32.mrb[0].mxu0
        %v1259 = vadd.f32 %v911, %v1258
        %v1260 = vpop.f32.mrb[0].mxu0
        %v1261 = vadd.f32 %v911, %v1260
        %1262 = vmatprep.mubr.f32.mxu0 0.0
        %1263 = vmatmul.mubr.f32.gmra.mrb[0].mxu0 %v1019
        %v1264 = vpop.f32.mrb[0].mxu0
        %v1265 = vadd.f32 %v916, %v1264
        %v1266 = vpop.f32.mrb[0].mxu0
        %v1267 = vadd.f32 %v916, %v1266
        %1268 = vmatprep.mubr.f32.mxu0 0.0
        %1269 = vmatmul.mubr.f32.gmra.mrb[0].mxu0 %v1022
        %v1270 = vpop.f32.mrb[0].mxu0
        %v1271 = vadd.f32 %v921, %v1270
        %v1272 = vpop.f32.mrb[0].mxu0
        %v1273 = vadd.f32 %v921, %v1272
        %1274 = vmatprep.mubr.f32.mxu0 0.0
        %1275 = vmatmul.mubr.f32.gmra.mrb[0].mxu0 %v1025
        %v1276 = vpop.f32.mrb[0].mxu0
        %v1277 = vadd.f32 %v926, %v1276
        %v1278 = vpop.f32.mrb[0].mxu0
        %v1279 = vadd.f32 %v926, %v1278
        %1280 = vmatprep.mubr.f32.mxu0 0.0
        %1281 = vmatmul.mubr.f32.gmra.mrb[0].mxu0 %v1028
        %v1282 = vpop.f32.mrb[0].mxu0
        %v1283 = vadd.f32 %v931, %v1282
        %v1284 = vpop.f32.mrb[0].mxu0
        %v1285 = vadd.f32 %v931, %v1284
        %1286 = vdwg.mxu0
        %v1287 = vmul.f32 %v1097, %v1097
        %v1288 = vmul.f32 %v1099, %v1099
        %v1289 = vmul.f32 %v1103, %v1103
        %v1290 = vmul.f32 %v1105, %v1105
        %v1291 = vmul.f32 %v1109, %v1109
        %v1292 = vmul.f32 %v1111, %v1111
        %v1293 = vmul.f32 %v1115, %v1115
        %v1294 = vmul.f32 %v1117, %v1117
        %v1295 = vmul.f32 %v1121, %v1121
        %v1296 = vmul.f32 %v1123, %v1123
        %v1297 = vmul.f32 %v1127, %v1127
        %v1298 = vmul.f32 %v1129, %v1129
        %v1299 = vmul.f32 %v1133, %v1133
        %v1300 = vmul.f32 %v1135, %v1135
        %v1301 = vmul.f32 %v1139, %v1139
        %v1302 = vmul.f32 %v1141, %v1141
        %v1303 = vmul.f32 %v1145, %v1145
        %v1304 = vmul.f32 %v1147, %v1147
        %v1305 = vmul.f32 %v1151, %v1151
        %v1306 = vmul.f32 %v1153, %v1153
        %v1307 = vmul.f32 %v1157, %v1157
        %v1308 = vmul.f32 %v1159, %v1159
        %v1309 = vmul.f32 %v1163, %v1163
        %v1310 = vmul.f32 %v1165, %v1165
        %v1311 = vmul.f32 %v1169, %v1169
        %v1312 = vmul.f32 %v1171, %v1171
        %v1313 = vmul.f32 %v1175, %v1175
        %v1314 = vmul.f32 %v1177, %v1177
        %v1315 = vmul.f32 %v1181, %v1181
        %v1316 = vmul.f32 %v1183, %v1183
        %v1317 = vmul.f32 %v1187, %v1187
        %v1318 = vmul.f32 %v1189, %v1189
        %v1319 = vmul.f32 %v1193, %v1193
        %v1320 = vmul.f32 %v1195, %v1195
        %v1321 = vmul.f32 %v1199, %v1199
        %v1322 = vmul.f32 %v1201, %v1201
        %v1323 = vmul.f32 %v1205, %v1205
        %v1324 = vmul.f32 %v1207, %v1207
        %v1325 = vmul.f32 %v1211, %v1211
        %v1326 = vmul.f32 %v1213, %v1213
        %v1327 = vmul.f32 %v1217, %v1217
        %v1328 = vmul.f32 %v1219, %v1219
        %v1329 = vmul.f32 %v1223, %v1223
        %v1330 = vmul.f32 %v1225, %v1225
        %v1331 = vmul.f32 %v1229, %v1229
        %v1332 = vmul.f32 %v1231, %v1231
        %v1333 = vmul.f32 %v1235, %v1235
        %v1334 = vmul.f32 %v1237, %v1237
        %v1335 = vmul.f32 %v1241, %v1241
        %v1336 = vmul.f32 %v1243, %v1243
        %v1337 = vmul.f32 %v1247, %v1247
        %v1338 = vmul.f32 %v1249, %v1249
        %v1339 = vmul.f32 %v1253, %v1253
        %v1340 = vmul.f32 %v1255, %v1255
        %v1341 = vmul.f32 %v1259, %v1259
        %v1342 = vmul.f32 %v1261, %v1261
        %v1343 = vmul.f32 %v1265, %v1265
        %v1344 = vmul.f32 %v1267, %v1267
        %v1345 = vmul.f32 %v1271, %v1271
        %v1346 = vmul.f32 %v1273, %v1273
        %v1347 = vmul.f32 %v1277, %v1277
        %v1348 = vmul.f32 %v1279, %v1279
        %v1349 = vmul.f32 %v1283, %v1283
        %v1350 = vmul.f32 %v1285, %v1285
        %1351 = vmatprep.subr.mxu0 %v1288
        %1352 = vmatpush1.msra.mxu0 %v1287
        %1353 = vmatprep.subr.mxu0 %v1290
        %1354 = vmatpush1.msra.mxu0 %v1289
        %1355 = vmatprep.subr.mxu0 %v1292
        %1356 = vmatpush1.msra.mxu0 %v1291
        %1357 = vmatprep.subr.mxu0 %v1294
        %1358 = vmatpush1.msra.mxu0 %v1293
        %1359 = vmatprep.subr.mxu0 %v1296
        %1360 = vmatpush1.msra.mxu0 %v1295
        %1361 = vmatprep.subr.mxu0 %v1298
        %1362 = vmatpush1.msra.mxu0 %v1297
        %1363 = vmatprep.subr.mxu0 %v1300
        %1364 = vmatpush1.msra.mxu0 %v1299
        %1365 = vmatprep.subr.mxu0 %v1302
        %1366 = vmatpush1.msra.mxu0 %v1301
        %1367 = vmatprep.subr.mxu0 %v1304
        %1368 = vmatpush1.msra.mxu0 %v1303
        %1369 = vmatprep.subr.mxu0 %v1306
        %1370 = vmatpush1.msra.mxu0 %v1305
        %1371 = vmatprep.subr.mxu0 %v1308
        %1372 = vmatpush1.msra.mxu0 %v1307
        %1373 = vmatprep.subr.mxu0 %v1310
        %1374 = vmatpush1.msra.mxu0 %v1309
        %1375 = vmatprep.subr.mxu0 %v1312
        %1376 = vmatpush1.msra.mxu0 %v1311
        %1377 = vmatprep.subr.mxu0 %v1314
        %1378 = vmatpush1.msra.mxu0 %v1313
        %1379 = vmatprep.subr.mxu0 %v1316
        %1380 = vmatpush1.msra.mxu0 %v1315
        %1381 = vmatprep.subr.mxu0 %v1318
        %1382 = vmatpush1.msra.mxu0 %v1317
        %1383 = vmatprep.subr.mxu0 %v1320
        %1384 = vmatpush1.msra.mxu0 %v1319
        %1385 = vmatprep.subr.mxu0 %v1322
        %1386 = vmatpush1.msra.mxu0 %v1321
        %1387 = vmatprep.subr.mxu0 %v1324
        %1388 = vmatpush1.msra.mxu0 %v1323
        %1389 = vmatprep.subr.mxu0 %v1326
        %1390 = vmatpush1.msra.mxu0 %v1325
        %1391 = vmatprep.subr.mxu0 %v1328
        %1392 = vmatpush1.msra.mxu0 %v1327
        %1393 = vmatprep.subr.mxu0 %v1330
        %1394 = vmatpush1.msra.mxu0 %v1329
        %1395 = vmatprep.subr.mxu0 %v1332
        %1396 = vmatpush1.msra.mxu0 %v1331
        %1397 = vmatprep.subr.mxu0 %v1334
        %1398 = vmatpush1.msra.mxu0 %v1333
        %1399 = vmatprep.subr.mxu0 %v1336
        %1400 = vmatpush1.msra.mxu0 %v1335
        %1401 = vmatprep.subr.mxu0 %v1338
        %1402 = vmatpush1.msra.mxu0 %v1337
        %1403 = vmatprep.subr.mxu0 %v1340
        %1404 = vmatpush1.msra.mxu0 %v1339
        %1405 = vmatprep.subr.mxu0 %v1342
        %1406 = vmatpush1.msra.mxu0 %v1341
        %1407 = vmatprep.subr.mxu0 %v1344
        %1408 = vmatpush1.msra.mxu0 %v1343
        %1409 = vmatprep.subr.mxu0 %v1346
        %1410 = vmatpush1.msra.mxu0 %v1345
        %1411 = vmatprep.subr.mxu0 %v1348
        %1412 = vmatpush1.msra.mxu0 %v1347
        %1413 = vmatprep.subr.mxu0 %v1350
        %1414 = vmatpush1.msra.mxu0 %v1349
        %1415 = vmatprep.mubr.f32.mxu0 %v739
        %1416 = vmatmul.mubr.f32.gmra.mrb[0].mxu0 %v738
        %v1417 = vpop.f32.mrb[0].mxu0
        %v1418 = vadd.f32 1e-05, %v1417
        %v1419 = vpop.f32.mrb[0].mxu0
        %v1420 = vadd.f32 1e-05, %v1419
        %1421 = vdwg.mxu0
        %v1422 = vrsqrt.pop %v1418
        %v1423 = vrsqrt.pop %v1420
        %vm1424 = vcmask 64512
        %v1425 = vsel %vm1424, %v740, 0
        %v1427 = vsel %vm1424, %v741, 0
        %v1429 = vsel %vm1424, %v742, 0
        %v1431 = vsel %vm1424, %v743, 0
        %v1433 = vsel %vm1424, %v744, 0
        %v1435 = vsel %vm1424, %v745, 0
        %v1437 = vsel %vm1424, %v746, 0
        %v1439 = vsel %vm1424, %v747, 0
        %v1441 = vsel %vm1424, %v748, 0
        %v1443 = vsel %vm1424, %v749, 0
        %v1445 = vsel %vm1424, %v750, 0
        %v1447 = vsel %vm1424, %v751, 0
        %v1449 = vsel %vm1424, %v752, 0
        %v1451 = vsel %vm1424, %v753, 0
        %v1453 = vsel %vm1424, %v754, 0
        %v1455 = vsel %vm1424, %v755, 0
        %v1457 = vsel %vm1424, %v756, 0
        %v1459 = vsel %vm1424, %v757, 0
        %v1461 = vsel %vm1424, %v758, 0
        %v1463 = vsel %vm1424, %v759, 0
        %v1465 = vsel %vm1424, %v760, 0
        %v1467 = vsel %vm1424, %v761, 0
        %v1469 = vsel %vm1424, %v762, 0
        %v1471 = vsel %vm1424, %v763, 0
        %v1473 = vsel %vm1424, %v764, 0
        %v1475 = vsel %vm1424, %v765, 0
        %v1477 = vsel %vm1424, %v766, 0
        %v1479 = vsel %vm1424, %v767, 0
        %v1481 = vsel %vm1424, %v768, 0
        %v1483 = vsel %vm1424, %v769, 0
        %v1485 = vsel %vm1424, %v770, 0
        %v1487 = vsel %vm1424, %v771, 0
        %1489 = vmatprep.subr.mxu0 %v1423
        %1490 = vmatpush1.msra.mxu0 %v1422
        %1491 = vmatprep.subr.mxu0 0.0
        %1492 = vmatpush1.msra.mxu0 0.0
        %1493 = vmatprep.subr.mxu0 0.0
        %1494 = vmatpush1.msra.mxu0 0.0
        %1495 = vmatprep.subr.mxu0 0.0
        %1496 = vmatpush1.msra.mxu0 0.0
        %1497 = vmatprep.subr.mxu0 0.0
        %1498 = vmatpush1.msra.mxu0 0.0
        %1499 = vmatprep.subr.mxu0 0.0
        %1500 = vmatpush1.msra.mxu0 0.0
        %1501 = vmatprep.subr.mxu0 0.0
        %1502 = vmatpush1.msra.mxu0 0.0
        %1503 = vmatprep.subr.mxu0 0.0
        %1504 = vmatpush1.msra.mxu0 0.0
        %1505 = vmatprep.subr.mxu0 0.0
        %1506 = vmatpush1.msra.mxu0 0.0
        %1507 = vmatprep.subr.mxu0 0.0
        %1508 = vmatpush1.msra.mxu0 0.0
        %1509 = vmatprep.subr.mxu0 0.0
        %1510 = vmatpush1.msra.mxu0 0.0
        %1511 = vmatprep.subr.mxu0 0.0
        %1512 = vmatpush1.msra.mxu0 0.0
        %1513 = vmatprep.subr.mxu0 0.0
        %1514 = vmatpush1.msra.mxu0 0.0
        %1515 = vmatprep.subr.mxu0 0.0
        %1516 = vmatpush1.msra.mxu0 0.0
        %1517 = vmatprep.subr.mxu0 0.0
        %1518 = vmatpush1.msra.mxu0 0.0
        %1519 = vmatprep.subr.mxu0 0.0
        %1520 = vmatpush1.msra.mxu0 0.0
        %1521 = vmatprep.subr.mxu0 0.0
        %1522 = vmatpush1.msra.mxu0 0.0
        %1523 = vmatprep.subr.mxu0 0.0
        %1524 = vmatpush1.msra.mxu0 0.0
        %1525 = vmatprep.subr.mxu0 0.0
        %1526 = vmatpush1.msra.mxu0 0.0
        %1527 = vmatprep.subr.mxu0 0.0
        %1528 = vmatpush1.msra.mxu0 0.0
        %1529 = vmatprep.subr.mxu0 0.0
        %1530 = vmatpush1.msra.mxu0 0.0
        %1531 = vmatprep.subr.mxu0 0.0
        %1532 = vmatpush1.msra.mxu0 0.0
        %1533 = vmatprep.subr.mxu0 0.0
        %1534 = vmatpush1.msra.mxu0 0.0
        %1535 = vmatprep.subr.mxu0 0.0
        %1536 = vmatpush1.msra.mxu0 0.0
        %1537 = vmatprep.subr.mxu0 0.0
        %1538 = vmatpush1.msra.mxu0 0.0
        %1539 = vmatprep.subr.mxu0 0.0
        %1540 = vmatpush1.msra.mxu0 0.0
        %1541 = vmatprep.subr.mxu0 0.0
        %1542 = vmatpush1.msra.mxu0 0.0
        %1543 = vmatprep.subr.mxu0 0.0
        %1544 = vmatpush1.msra.mxu0 0.0
        %1545 = vmatprep.subr.mxu0 0.0
        %1546 = vmatpush1.msra.mxu0 0.0
        %1547 = vmatprep.subr.mxu0 0.0
        %1548 = vmatpush1.msra.mxu0 0.0
        %1549 = vmatprep.subr.mxu0 0.0
        %1550 = vmatpush1.msra.mxu0 0.0
        %1551 = vmatprep.subr.mxu0 0.0
        %1552 = vmatpush1.msra.mxu0 0.0
        %1553 = vmatprep.mubr.f32.mxu0 0.0
        %1554 = vmatmul.mubr.f32.gmra.mrb[0].mxu0 %v1425
        %v1555 = vpop.f32.mrb[0].mxu0
        %v1556 = vadd.f32 0.0, %v1555
        %v1557 = vpop.f32.mrb[0].mxu0
        %v1558 = vadd.f32 0.0, %v1557
        %1559 = vmatprep.mubr.f32.mxu0 0.0
        %1560 = vmatmul.mubr.f32.gmra.mrb[0].mxu0 %v1427
        %v1561 = vpop.f32.mrb[0].mxu0
        %v1562 = vadd.f32 0.0, %v1561
        %v1563 = vpop.f32.mrb[0].mxu0
        %v1564 = vadd.f32 0.0, %v1563
        %1565 = vmatprep.mubr.f32.mxu0 0.0
        %1566 = vmatmul.mubr.f32.gmra.mrb[0].mxu0 %v1429
        %v1567 = vpop.f32.mrb[0].mxu0
        %v1568 = vadd.f32 0.0, %v1567
        %v1569 = vpop.f32.mrb[0].mxu0
        %v1570 = vadd.f32 0.0, %v1569
        %1571 = vmatprep.mubr.f32.mxu0 0.0
        %1572 = vmatmul.mubr.f32.gmra.mrb[0].mxu0 %v1431
        %v1573 = vpop.f32.mrb[0].mxu0
        %v1574 = vadd.f32 0.0, %v1573
        %v1575 = vpop.f32.mrb[0].mxu0
        %v1576 = vadd.f32 0.0, %v1575
        %1577 = vmatprep.mubr.f32.mxu0 0.0
        %1578 = vmatmul.mubr.f32.gmra.mrb[0].mxu0 %v1433
        %v1579 = vpop.f32.mrb[0].mxu0
        %v1580 = vadd.f32 0.0, %v1579
        %v1581 = vpop.f32.mrb[0].mxu0
        %v1582 = vadd.f32 0.0, %v1581
        %1583 = vmatprep.mubr.f32.mxu0 0.0
        %1584 = vmatmul.mubr.f32.gmra.mrb[0].mxu0 %v1435
        %v1585 = vpop.f32.mrb[0].mxu0
        %v1586 = vadd.f32 0.0, %v1585
        %v1587 = vpop.f32.mrb[0].mxu0
        %v1588 = vadd.f32 0.0, %v1587
        %1589 = vmatprep.mubr.f32.mxu0 0.0
        %1590 = vmatmul.mubr.f32.gmra.mrb[0].mxu0 %v1437
        %v1591 = vpop.f32.mrb[0].mxu0
        %v1592 = vadd.f32 0.0, %v1591
        %v1593 = vpop.f32.mrb[0].mxu0
        %v1594 = vadd.f32 0.0, %v1593
        %1595 = vmatprep.mubr.f32.mxu0 0.0
        %1596 = vmatmul.mubr.f32.gmra.mrb[0].mxu0 %v1439
        %v1597 = vpop.f32.mrb[0].mxu0
        %v1598 = vadd.f32 0.0, %v1597
        %v1599 = vpop.f32.mrb[0].mxu0
        %v1600 = vadd.f32 0.0, %v1599
        %1601 = vmatprep.mubr.f32.mxu0 0.0
        %1602 = vmatmul.mubr.f32.gmra.mrb[0].mxu0 %v1441
        %v1603 = vpop.f32.mrb[0].mxu0
        %v1604 = vadd.f32 0.0, %v1603
        %v1605 = vpop.f32.mrb[0].mxu0
        %v1606 = vadd.f32 0.0, %v1605
        %1607 = vmatprep.mubr.f32.mxu0 0.0
        %1608 = vmatmul.mubr.f32.gmra.mrb[0].mxu0 %v1443
        %v1609 = vpop.f32.mrb[0].mxu0
        %v1610 = vadd.f32 0.0, %v1609
        %v1611 = vpop.f32.mrb[0].mxu0
        %v1612 = vadd.f32 0.0, %v1611
        %1613 = vmatprep.mubr.f32.mxu0 0.0
        %1614 = vmatmul.mubr.f32.gmra.mrb[0].mxu0 %v1445
        %v1615 = vpop.f32.mrb[0].mxu0
        %v1616 = vadd.f32 0.0, %v1615
        %v1617 = vpop.f32.mrb[0].mxu0
        %v1618 = vadd.f32 0.0, %v1617
        %1619 = vmatprep.mubr.f32.mxu0 0.0
        %1620 = vmatmul.mubr.f32.gmra.mrb[0].mxu0 %v1447
        %v1621 = vpop.f32.mrb[0].mxu0
        %v1622 = vadd.f32 0.0, %v1621
        %v1623 = vpop.f32.mrb[0].mxu0
        %v1624 = vadd.f32 0.0, %v1623
        %1625 = vmatprep.mubr.f32.mxu0 0.0
        %1626 = vmatmul.mubr.f32.gmra.mrb[0].mxu0 %v1449
        %v1627 = vpop.f32.mrb[0].mxu0
        %v1628 = vadd.f32 0.0, %v1627
        %v1629 = vpop.f32.mrb[0].mxu0
        %v1630 = vadd.f32 0.0, %v1629
        %1631 = vmatprep.mubr.f32.mxu0 0.0
        %1632 = vmatmul.mubr.f32.gmra.mrb[0].mxu0 %v1451
        %v1633 = vpop.f32.mrb[0].mxu0
        %v1634 = vadd.f32 0.0, %v1633
        %v1635 = vpop.f32.mrb[0].mxu0
        %v1636 = vadd.f32 0.0, %v1635
        %1637 = vmatprep.mubr.f32.mxu0 0.0
        %1638 = vmatmul.mubr.f32.gmra.mrb[0].mxu0 %v1453
        %v1639 = vpop.f32.mrb[0].mxu0
        %v1640 = vadd.f32 0.0, %v1639
        %v1641 = vpop.f32.mrb[0].mxu0
        %v1642 = vadd.f32 0.0, %v1641
        %1643 = vmatprep.mubr.f32.mxu0 0.0
        %1644 = vmatmul.mubr.f32.gmra.mrb[0].mxu0 %v1455
        %v1645 = vpop.f32.mrb[0].mxu0
        %v1646 = vadd.f32 0.0, %v1645
        %v1647 = vpop.f32.mrb[0].mxu0
        %v1648 = vadd.f32 0.0, %v1647
        %1649 = vmatprep.mubr.f32.mxu0 0.0
        %1650 = vmatmul.mubr.f32.gmra.mrb[0].mxu0 %v1457
        %v1651 = vpop.f32.mrb[0].mxu0
        %v1652 = vadd.f32 0.0, %v1651
        %v1653 = vpop.f32.mrb[0].mxu0
        %v1654 = vadd.f32 0.0, %v1653
        %1655 = vmatprep.mubr.f32.mxu0 0.0
        %1656 = vmatmul.mubr.f32.gmra.mrb[0].mxu0 %v1459
        %v1657 = vpop.f32.mrb[0].mxu0
        %v1658 = vadd.f32 0.0, %v1657
        %v1659 = vpop.f32.mrb[0].mxu0
        %v1660 = vadd.f32 0.0, %v1659
        %1661 = vmatprep.mubr.f32.mxu0 0.0
        %1662 = vmatmul.mubr.f32.gmra.mrb[0].mxu0 %v1461
        %v1663 = vpop.f32.mrb[0].mxu0
        %v1664 = vadd.f32 0.0, %v1663
        %v1665 = vpop.f32.mrb[0].mxu0
        %v1666 = vadd.f32 0.0, %v1665
        %1667 = vmatprep.mubr.f32.mxu0 0.0
        %1668 = vmatmul.mubr.f32.gmra.mrb[0].mxu0 %v1463
        %v1669 = vpop.f32.mrb[0].mxu0
        %v1670 = vadd.f32 0.0, %v1669
        %v1671 = vpop.f32.mrb[0].mxu0
        %v1672 = vadd.f32 0.0, %v1671
        %1673 = vmatprep.mubr.f32.mxu0 0.0
        %1674 = vmatmul.mubr.f32.gmra.mrb[0].mxu0 %v1465
        %v1675 = vpop.f32.mrb[0].mxu0
        %v1676 = vadd.f32 0.0, %v1675
        %v1677 = vpop.f32.mrb[0].mxu0
        %v1678 = vadd.f32 0.0, %v1677
        %1679 = vmatprep.mubr.f32.mxu0 0.0
        %1680 = vmatmul.mubr.f32.gmra.mrb[0].mxu0 %v1467
        %v1681 = vpop.f32.mrb[0].mxu0
        %v1682 = vadd.f32 0.0, %v1681
        %v1683 = vpop.f32.mrb[0].mxu0
        %v1684 = vadd.f32 0.0, %v1683
        %1685 = vmatprep.mubr.f32.mxu0 0.0
        %1686 = vmatmul.mubr.f32.gmra.mrb[0].mxu0 %v1469
        %v1687 = vpop.f32.mrb[0].mxu0
        %v1688 = vadd.f32 0.0, %v1687
        %v1689 = vpop.f32.mrb[0].mxu0
        %v1690 = vadd.f32 0.0, %v1689
        %1691 = vmatprep.mubr.f32.mxu0 0.0
        %1692 = vmatmul.mubr.f32.gmra.mrb[0].mxu0 %v1471
        %v1693 = vpop.f32.mrb[0].mxu0
        %v1694 = vadd.f32 0.0, %v1693
        %v1695 = vpop.f32.mrb[0].mxu0
        %v1696 = vadd.f32 0.0, %v1695
        %1697 = vmatprep.mubr.f32.mxu0 0.0
        %1698 = vmatmul.mubr.f32.gmra.mrb[0].mxu0 %v1473
        %v1699 = vpop.f32.mrb[0].mxu0
        %v1700 = vadd.f32 0.0, %v1699
        %v1701 = vpop.f32.mrb[0].mxu0
        %v1702 = vadd.f32 0.0, %v1701
        %1703 = vmatprep.mubr.f32.mxu0 0.0
        %1704 = vmatmul.mubr.f32.gmra.mrb[0].mxu0 %v1475
        %v1705 = vpop.f32.mrb[0].mxu0
        %v1706 = vadd.f32 0.0, %v1705
        %v1707 = vpop.f32.mrb[0].mxu0
        %v1708 = vadd.f32 0.0, %v1707
        %1709 = vmatprep.mubr.f32.mxu0 0.0
        %1710 = vmatmul.mubr.f32.gmra.mrb[0].mxu0 %v1477
        %v1711 = vpop.f32.mrb[0].mxu0
        %v1712 = vadd.f32 0.0, %v1711
        %v1713 = vpop.f32.mrb[0].mxu0
        %v1714 = vadd.f32 0.0, %v1713
        %1715 = vmatprep.mubr.f32.mxu0 0.0
        %1716 = vmatmul.mubr.f32.gmra.mrb[0].mxu0 %v1479
        %v1717 = vpop.f32.mrb[0].mxu0
        %v1718 = vadd.f32 0.0, %v1717
        %v1719 = vpop.f32.mrb[0].mxu0
        %v1720 = vadd.f32 0.0, %v1719
        %1721 = vmatprep.mubr.f32.mxu0 0.0
        %1722 = vmatmul.mubr.f32.gmra.mrb[0].mxu0 %v1481
        %v1723 = vpop.f32.mrb[0].mxu0
        %v1724 = vadd.f32 0.0, %v1723
        %v1725 = vpop.f32.mrb[0].mxu0
        %v1726 = vadd.f32 0.0, %v1725
        %1727 = vmatprep.mubr.f32.mxu0 0.0
        %1728 = vmatmul.mubr.f32.gmra.mrb[0].mxu0 %v1483
        %v1729 = vpop.f32.mrb[0].mxu0
        %v1730 = vadd.f32 0.0, %v1729
        %v1731 = vpop.f32.mrb[0].mxu0
        %v1732 = vadd.f32 0.0, %v1731
        %1733 = vmatprep.mubr.f32.mxu0 0.0
        %1734 = vmatmul.mubr.f32.gmra.mrb[0].mxu0 %v1485
        %v1735 = vpop.f32.mrb[0].mxu0
        %v1736 = vadd.f32 0.0, %v1735
        %v1737 = vpop.f32.mrb[0].mxu0
        %v1738 = vadd.f32 0.0, %v1737
        %1739 = vmatprep.mubr.f32.mxu0 0.0
        %1740 = vmatmul.mubr.f32.gmra.mrb[0].mxu0 %v1487
        %v1741 = vpop.f32.mrb[0].mxu0
        %v1742 = vadd.f32 0.0, %v1741
        %v1743 = vpop.f32.mrb[0].mxu0
        %v1744 = vadd.f32 0.0, %v1743
        %1745 = vdwg.mxu0
        %v1746 = vmul.f32 %v1097, %v1556
        %v1747 = vmul.f32 %v1099, %v1558
        %v1748 = vmul.f32 %v1103, %v1562
        %v1749 = vmul.f32 %v1105, %v1564
        %v1750 = vmul.f32 %v1109, %v1568
        %v1751 = vmul.f32 %v1111, %v1570
        %v1752 = vmul.f32 %v1115, %v1574
        %v1753 = vmul.f32 %v1117, %v1576
        %v1754 = vmul.f32 %v1121, %v1580
        %v1755 = vmul.f32 %v1123, %v1582
        %v1756 = vmul.f32 %v1127, %v1586
        %v1757 = vmul.f32 %v1129, %v1588
        %v1758 = vmul.f32 %v1133, %v1592
        %v1759 = vmul.f32 %v1135, %v1594
        %v1760 = vmul.f32 %v1139, %v1598
        %v1761 = vmul.f32 %v1141, %v1600
        %v1762 = vmul.f32 %v1145, %v1604
        %v1763 = vmul.f32 %v1147, %v1606
        %v1764 = vmul.f32 %v1151, %v1610
        %v1765 = vmul.f32 %v1153, %v1612
        %v1766 = vmul.f32 %v1157, %v1616
        %v1767 = vmul.f32 %v1159, %v1618
        %v1768 = vmul.f32 %v1163, %v1622
        %v1769 = vmul.f32 %v1165, %v1624
        %v1770 = vmul.f32 %v1169, %v1628
        %v1771 = vmul.f32 %v1171, %v1630
        %v1772 = vmul.f32 %v1175, %v1634
        %v1773 = vmul.f32 %v1177, %v1636
        %v1774 = vmul.f32 %v1181, %v1640
        %v1775 = vmul.f32 %v1183, %v1642
        %v1776 = vmul.f32 %v1187, %v1646
        %v1777 = vmul.f32 %v1189, %v1648
        %v1778 = vmul.f32 %v1193, %v1652
        %v1779 = vmul.f32 %v1195, %v1654
        %v1780 = vmul.f32 %v1199, %v1658
        %v1781 = vmul.f32 %v1201, %v1660
        %v1782 = vmul.f32 %v1205, %v1664
        %v1783 = vmul.f32 %v1207, %v1666
        %v1784 = vmul.f32 %v1211, %v1670
        %v1785 = vmul.f32 %v1213, %v1672
        %v1786 = vmul.f32 %v1217, %v1676
        %v1787 = vmul.f32 %v1219, %v1678
        %v1788 = vmul.f32 %v1223, %v1682
        %v1789 = vmul.f32 %v1225, %v1684
        %v1790 = vmul.f32 %v1229, %v1688
        %v1791 = vmul.f32 %v1231, %v1690
        %v1792 = vmul.f32 %v1235, %v1694
        %v1793 = vmul.f32 %v1237, %v1696
        %v1794 = vmul.f32 %v1241, %v1700
        %v1795 = vmul.f32 %v1243, %v1702
        %v1796 = vmul.f32 %v1247, %v1706
        %v1797 = vmul.f32 %v1249, %v1708
        %v1798 = vmul.f32 %v1253, %v1712
        %v1799 = vmul.f32 %v1255, %v1714
        %v1800 = vmul.f32 %v1259, %v1718
        %v1801 = vmul.f32 %v1261, %v1720
        %v1802 = vmul.f32 %v1265, %v1724
        %v1803 = vmul.f32 %v1267, %v1726
        %v1804 = vmul.f32 %v1271, %v1730
        %v1805 = vmul.f32 %v1273, %v1732
        %v1806 = vmul.f32 %v1277, %v1736
        %v1807 = vmul.f32 %v1279, %v1738
        %v1808 = vmul.f32 %v1283, %v1742
        %v1809 = vmul.f32 %v1285, %v1744
        %1810 = vset.pattern.permute.xlu0 9
        %1811 = vperm.xlu0 %1810, %v740
        %v1812 = vpop.permute.xlu0 %1811
        %1814 = vset.pattern.permute.xlu0 9
        %1815 = vperm.xlu0 %1814, %v741
        %v1816 = vpop.permute.xlu0 %1815
        %1818 = vset.pattern.permute.xlu0 9
        %1819 = vperm.xlu0 %1818, %v742
        %v1820 = vpop.permute.xlu0 %1819
        %1822 = vset.pattern.permute.xlu0 9
        %1823 = vperm.xlu0 %1822, %v743
        %v1824 = vpop.permute.xlu0 %1823
        %1826 = vset.pattern.permute.xlu0 9
        %1827 = vperm.xlu0 %1826, %v744
        %v1828 = vpop.permute.xlu0 %1827
        %1830 = vset.pattern.permute.xlu0 9
        %1831 = vperm.xlu0 %1830, %v745
        %v1832 = vpop.permute.xlu0 %1831
        %1834 = vset.pattern.permute.xlu0 9
        %1835 = vperm.xlu0 %1834, %v746
        %v1836 = vpop.permute.xlu0 %1835
        %1838 = vset.pattern.permute.xlu0 9
        %1839 = vperm.xlu0 %1838, %v747
        %v1840 = vpop.permute.xlu0 %1839
        %1842 = vset.pattern.permute.xlu0 9
        %1843 = vperm.xlu0 %1842, %v748
        %v1844 = vpop.permute.xlu0 %1843
        %1846 = vset.pattern.permute.xlu0 9
        %1847 = vperm.xlu0 %1846, %v749
        %v1848 = vpop.permute.xlu0 %1847
        %1850 = vset.pattern.permute.xlu0 9
        %1851 = vperm.xlu0 %1850, %v750
        %v1852 = vpop.permute.xlu0 %1851
        %1854 = vset.pattern.permute.xlu0 9
        %1855 = vperm.xlu0 %1854, %v751
        %v1856 = vpop.permute.xlu0 %1855
        %1858 = vset.pattern.permute.xlu0 9
        %1859 = vperm.xlu0 %1858, %v752
        %v1860 = vpop.permute.xlu0 %1859
        %1862 = vset.pattern.permute.xlu0 9
        %1863 = vperm.xlu0 %1862, %v753
        %v1864 = vpop.permute.xlu0 %1863
        %1866 = vset.pattern.permute.xlu0 9
        %1867 = vperm.xlu0 %1866, %v754
        %v1868 = vpop.permute.xlu0 %1867
        %1870 = vset.pattern.permute.xlu0 9
        %1871 = vperm.xlu0 %1870, %v755
        %v1872 = vpop.permute.xlu0 %1871
        %1874 = vset.pattern.permute.xlu0 9
        %1875 = vperm.xlu0 %1874, %v756
        %v1876 = vpop.permute.xlu0 %1875
        %1878 = vset.pattern.permute.xlu0 9
        %1879 = vperm.xlu0 %1878, %v757
        %v1880 = vpop.permute.xlu0 %1879
        %1882 = vset.pattern.permute.xlu0 9
        %1883 = vperm.xlu0 %1882, %v758
        %v1884 = vpop.permute.xlu0 %1883
        %1886 = vset.pattern.permute.xlu0 9
        %1887 = vperm.xlu0 %1886, %v759
        %v1888 = vpop.permute.xlu0 %1887
        %1890 = vset.pattern.permute.xlu0 9
        %1891 = vperm.xlu0 %1890, %v760
        %v1892 = vpop.permute.xlu0 %1891
        %1894 = vset.pattern.permute.xlu0 9
        %1895 = vperm.xlu0 %1894, %v761
        %v1896 = vpop.permute.xlu0 %1895
        %1898 = vset.pattern.permute.xlu0 9
        %1899 = vperm.xlu0 %1898, %v762
        %v1900 = vpop.permute.xlu0 %1899
        %1902 = vset.pattern.permute.xlu0 9
        %1903 = vperm.xlu0 %1902, %v763
        %v1904 = vpop.permute.xlu0 %1903
        %1906 = vset.pattern.permute.xlu0 9
        %1907 = vperm.xlu0 %1906, %v764
        %v1908 = vpop.permute.xlu0 %1907
        %1910 = vset.pattern.permute.xlu0 9
        %1911 = vperm.xlu0 %1910, %v765
        %v1912 = vpop.permute.xlu0 %1911
        %1914 = vset.pattern.permute.xlu0 9
        %1915 = vperm.xlu0 %1914, %v766
        %v1916 = vpop.permute.xlu0 %1915
        %1918 = vset.pattern.permute.xlu0 9
        %1919 = vperm.xlu0 %1918, %v767
        %v1920 = vpop.permute.xlu0 %1919
        %1922 = vset.pattern.permute.xlu0 9
        %1923 = vperm.xlu0 %1922, %v768
        %v1924 = vpop.permute.xlu0 %1923
        %1926 = vset.pattern.permute.xlu0 9
        %1927 = vperm.xlu0 %1926, %v769
        %v1928 = vpop.permute.xlu0 %1927
        %1930 = vset.pattern.permute.xlu0 9
        %1931 = vperm.xlu0 %1930, %v770
        %v1932 = vpop.permute.xlu0 %1931
        %1934 = vset.pattern.permute.xlu0 9
        %1935 = vperm.xlu0 %1934, %v771
        %v1936 = vpop.permute.xlu0 %1935
        %v1938 = vadd.f32 %v1746, %v1812
        %v1939 = vadd.f32 %v1747, %v1812
        %v1940 = vadd.f32 %v1748, %v1816
        %v1941 = vadd.f32 %v1749, %v1816
        %v1942 = vadd.f32 %v1750, %v1820
        %v1943 = vadd.f32 %v1751, %v1820
        %v1944 = vadd.f32 %v1752, %v1824
        %v1945 = vadd.f32 %v1753, %v1824
        %v1946 = vadd.f32 %v1754, %v1828
        %v1947 = vadd.f32 %v1755, %v1828
        %v1948 = vadd.f32 %v1756, %v1832
        %v1949 = vadd.f32 %v1757, %v1832
        %v1950 = vadd.f32 %v1758, %v1836
        %v1951 = vadd.f32 %v1759, %v1836
        %v1952 = vadd.f32 %v1760, %v1840
        %v1953 = vadd.f32 %v1761, %v1840
        %v1954 = vadd.f32 %v1762, %v1844
        %v1955 = vadd.f32 %v1763, %v1844
        %v1956 = vadd.f32 %v1764, %v1848
        %v1957 = vadd.f32 %v1765, %v1848
        %v1958 = vadd.f32 %v1766, %v1852
        %v1959 = vadd.f32 %v1767, %v1852
        %v1960 = vadd.f32 %v1768, %v1856
        %v1961 = vadd.f32 %v1769, %v1856
        %v1962 = vadd.f32 %v1770, %v1860
        %v1963 = vadd.f32 %v1771, %v1860
        %v1964 = vadd.f32 %v1772, %v1864
        %v1965 = vadd.f32 %v1773, %v1864
        %v1966 = vadd.f32 %v1774, %v1868
        %v1967 = vadd.f32 %v1775, %v1868
        %v1968 = vadd.f32 %v1776, %v1872
        %v1969 = vadd.f32 %v1777, %v1872
        %v1970 = vadd.f32 %v1778, %v1876
        %v1971 = vadd.f32 %v1779, %v1876
        %v1972 = vadd.f32 %v1780, %v1880
        %v1973 = vadd.f32 %v1781, %v1880
        %v1974 = vadd.f32 %v1782, %v1884
        %v1975 = vadd.f32 %v1783, %v1884
        %v1976 = vadd.f32 %v1784, %v1888
        %v1977 = vadd.f32 %v1785, %v1888
        %v1978 = vadd.f32 %v1786, %v1892
        %v1979 = vadd.f32 %v1787, %v1892
        %v1980 = vadd.f32 %v1788, %v1896
        %v1981 = vadd.f32 %v1789, %v1896
        %v1982 = vadd.f32 %v1790, %v1900
        %v1983 = vadd.f32 %v1791, %v1900
        %v1984 = vadd.f32 %v1792, %v1904
        %v1985 = vadd.f32 %v1793, %v1904
        %v1986 = vadd.f32 %v1794, %v1908
        %v1987 = vadd.f32 %v1795, %v1908
        %v1988 = vadd.f32 %v1796, %v1912
        %v1989 = vadd.f32 %v1797, %v1912
        %v1990 = vadd.f32 %v1798, %v1916
        %v1991 = vadd.f32 %v1799, %v1916
        %v1992 = vadd.f32 %v1800, %v1920
        %v1993 = vadd.f32 %v1801, %v1920
        %v1994 = vadd.f32 %v1802, %v1924
        %v1995 = vadd.f32 %v1803, %v1924
        %v1996 = vadd.f32 %v1804, %v1928
        %v1997 = vadd.f32 %v1805, %v1928
        %v1998 = vadd.f32 %v1806, %v1932
        %v1999 = vadd.f32 %v1807, %v1932
        %v2000 = vadd.f32 %v1808, %v1936
        %v2001 = vadd.f32 %v1809, %v1936
        %v2002 = vmax.f32 %v1938, 0.0
        %v2003 = vmax.f32 %v1939, 0.0
        %v2004 = vmax.f32 %v1940, 0.0
        %v2005 = vmax.f32 %v1941, 0.0
        %v2006 = vmax.f32 %v1942, 0.0
        %v2007 = vmax.f32 %v1943, 0.0
        %v2008 = vmax.f32 %v1944, 0.0
        %v2009 = vmax.f32 %v1945, 0.0
        %v2010 = vmax.f32 %v1946, 0.0
        %v2011 = vmax.f32 %v1947, 0.0
        %v2012 = vmax.f32 %v1948, 0.0
        %v2013 = vmax.f32 %v1949, 0.0
        %v2014 = vmax.f32 %v1950, 0.0
        %v2015 = vmax.f32 %v1951, 0.0
        %v2016 = vmax.f32 %v1952, 0.0
        %v2017 = vmax.f32 %v1953, 0.0
        %v2018 = vmax.f32 %v1954, 0.0
        %v2019 = vmax.f32 %v1955, 0.0
        %v2020 = vmax.f32 %v1956, 0.0
        %v2021 = vmax.f32 %v1957, 0.0
        %v2022 = vmax.f32 %v1958, 0.0
        %v2023 = vmax.f32 %v1959, 0.0
        %v2024 = vmax.f32 %v1960, 0.0
        %v2025 = vmax.f32 %v1961, 0.0
        %v2026 = vmax.f32 %v1962, 0.0
        %v2027 = vmax.f32 %v1963, 0.0
        %v2028 = vmax.f32 %v1964, 0.0
        %v2029 = vmax.f32 %v1965, 0.0
        %v2030 = vmax.f32 %v1966, 0.0
        %v2031 = vmax.f32 %v1967, 0.0
        %v2032 = vmax.f32 %v1968, 0.0
        %v2033 = vmax.f32 %v1969, 0.0
        %v2034 = vmax.f32 %v1970, 0.0
        %v2035 = vmax.f32 %v1971, 0.0
        %v2036 = vmax.f32 %v1972, 0.0
        %v2037 = vmax.f32 %v1973, 0.0
        %v2038 = vmax.f32 %v1974, 0.0
        %v2039 = vmax.f32 %v1975, 0.0
        %v2040 = vmax.f32 %v1976, 0.0
        %v2041 = vmax.f32 %v1977, 0.0
        %v2042 = vmax.f32 %v1978, 0.0
        %v2043 = vmax.f32 %v1979, 0.0
        %v2044 = vmax.f32 %v1980, 0.0
        %v2045 = vmax.f32 %v1981, 0.0
        %v2046 = vmax.f32 %v1982, 0.0
        %v2047 = vmax.f32 %v1983, 0.0
        %v2048 = vmax.f32 %v1984, 0.0
        %v2049 = vmax.f32 %v1985, 0.0
        %v2050 = vmax.f32 %v1986, 0.0
        %v2051 = vmax.f32 %v1987, 0.0
        %v2052 = vmax.f32 %v1988, 0.0
        %v2053 = vmax.f32 %v1989, 0.0
        %v2054 = vmax.f32 %v1990, 0.0
        %v2055 = vmax.f32 %v1991, 0.0
        %v2056 = vmax.f32 %v1992, 0.0
        %v2057 = vmax.f32 %v1993, 0.0
        %v2058 = vmax.f32 %v1994, 0.0
        %v2059 = vmax.f32 %v1995, 0.0
        %v2060 = vmax.f32 %v1996, 0.0
        %v2061 = vmax.f32 %v1997, 0.0
        %v2062 = vmax.f32 %v1998, 0.0
        %v2063 = vmax.f32 %v1999, 0.0
        %v2064 = vmax.f32 %v2000, 0.0
        %v2065 = vmax.f32 %v2001, 0.0
        %2066 = vmatprep.subr.mxu0 %v2003
        %2067 = vmatpush1.msra.mxu0 %v2002
        %2068 = vmatprep.subr.mxu0 %v2005
        %2069 = vmatpush1.msra.mxu0 %v2004
        %2070 = vmatprep.subr.mxu0 %v2007
        %2071 = vmatpush1.msra.mxu0 %v2006
        %2072 = vmatprep.subr.mxu0 %v2009
        %2073 = vmatpush1.msra.mxu0 %v2008
        %2074 = vmatprep.subr.mxu0 %v2011
        %2075 = vmatpush1.msra.mxu0 %v2010
        %2076 = vmatprep.subr.mxu0 %v2013
        %2077 = vmatpush1.msra.mxu0 %v2012
        %2078 = vmatprep.subr.mxu0 %v2015
        %2079 = vmatpush1.msra.mxu0 %v2014
        %2080 = vmatprep.subr.mxu0 %v2017
        %2081 = vmatpush1.msra.mxu0 %v2016
        %2082 = vmatprep.subr.mxu0 %v2019
        %2083 = vmatpush1.msra.mxu0 %v2018
        %2084 = vmatprep.subr.mxu0 %v2021
        %2085 = vmatpush1.msra.mxu0 %v2020
        %2086 = vmatprep.subr.mxu0 %v2023
        %2087 = vmatpush1.msra.mxu0 %v2022
        %2088 = vmatprep.subr.mxu0 %v2025
        %2089 = vmatpush1.msra.mxu0 %v2024
        %2090 = vmatprep.subr.mxu0 %v2027
        %2091 = vmatpush1.msra.mxu0 %v2026
        %2092 = vmatprep.subr.mxu0 %v2029
        %2093 = vmatpush1.msra.mxu0 %v2028
        %2094 = vmatprep.subr.mxu0 %v2031
        %2095 = vmatpush1.msra.mxu0 %v2030
        %2096 = vmatprep.subr.mxu0 %v2033
        %2097 = vmatpush1.msra.mxu0 %v2032
        %2098 = vmatprep.subr.mxu0 %v2035
        %2099 = vmatpush1.msra.mxu0 %v2034
        %2100 = vmatprep.subr.mxu0 %v2037
        %2101 = vmatpush1.msra.mxu0 %v2036
        %2102 = vmatprep.subr.mxu0 %v2039
        %2103 = vmatpush1.msra.mxu0 %v2038
        %2104 = vmatprep.subr.mxu0 %v2041
        %2105 = vmatpush1.msra.mxu0 %v2040
        %2106 = vmatprep.subr.mxu0 %v2043
        %2107 = vmatpush1.msra.mxu0 %v2042
        %2108 = vmatprep.subr.mxu0 %v2045
        %2109 = vmatpush1.msra.mxu0 %v2044
        %2110 = vmatprep.subr.mxu0 %v2047
        %2111 = vmatpush1.msra.mxu0 %v2046
        %2112 = vmatprep.subr.mxu0 %v2049
        %2113 = vmatpush1.msra.mxu0 %v2048
        %2114 = vmatprep.subr.mxu0 %v2051
        %2115 = vmatpush1.msra.mxu0 %v2050
        %2116 = vmatprep.subr.mxu0 %v2053
        %2117 = vmatpush1.msra.mxu0 %v2052
        %2118 = vmatprep.subr.mxu0 %v2055
        %2119 = vmatpush1.msra.mxu0 %v2054
        %2120 = vmatprep.subr.mxu0 %v2057
        %2121 = vmatpush1.msra.mxu0 %v2056
        %2122 = vmatprep.subr.mxu0 %v2059
        %2123 = vmatpush1.msra.mxu0 %v2058
        %2124 = vmatprep.subr.mxu0 %v2061
        %2125 = vmatpush1.msra.mxu0 %v2060
        %2126 = vmatprep.subr.mxu0 %v2063
        %2127 = vmatpush1.msra.mxu0 %v2062
        %2128 = vmatprep.subr.mxu0 %v2065
        %2129 = vmatpush1.msra.mxu0 %v2064
        %2130 = vmatprep.mubr.f32.mxu0 %v707
        %2131 = vmatmul.mubr.f32.gmra.mrb[0].mxu0 %v706
        %v2132 = vpop.f32.mrb[0].mxu0
        %v2133 = vadd.f32 0.0, %v2132
        %v2134 = vpop.f32.mrb[0].mxu0
        %v2135 = vadd.f32 0.0, %v2134
        %2136 = vmatprep.mubr.f32.mxu0 %v709
        %2137 = vmatmul.mubr.f32.gmra.mrb[0].mxu0 %v708
        %v2138 = vpop.f32.mrb[0].mxu0
        %v2139 = vadd.f32 0.0, %v2138
        %v2140 = vpop.f32.mrb[0].mxu0
        %v2141 = vadd.f32 0.0, %v2140
        %2142 = vmatprep.mubr.f32.mxu0 %v711
        %2143 = vmatmul.mubr.f32.gmra.mrb[0].mxu0 %v710
        %v2144 = vpop.f32.mrb[0].mxu0
        %v2145 = vadd.f32 0.0, %v2144
        %v2146 = vpop.f32.mrb[0].mxu0
        %v2147 = vadd.f32 0.0, %v2146
        %2148 = vmatprep.mubr.f32.mxu0 %v713
        %2149 = vmatmul.mubr.f32.gmra.mrb[0].mxu0 %v712
        %v2150 = vpop.f32.mrb[0].mxu0
        %v2151 = vadd.f32 0.0, %v2150
        %v2152 = vpop.f32.mrb[0].mxu0
        %v2153 = vadd.f32 0.0, %v2152
        %2154 = vmatprep.mubr.f32.mxu0 %v715
        %2155 = vmatmul.mubr.f32.gmra.mrb[0].mxu0 %v714
        %v2156 = vpop.f32.mrb[0].mxu0
        %v2157 = vadd.f32 0.0, %v2156
        %v2158 = vpop.f32.mrb[0].mxu0
        %v2159 = vadd.f32 0.0, %v2158
        %2160 = vmatprep.mubr.f32.mxu0 %v717
        %2161 = vmatmul.mubr.f32.gmra.mrb[0].mxu0 %v716
        %v2162 = vpop.f32.mrb[0].mxu0
        %v2163 = vadd.f32 0.0, %v2162
        %v2164 = vpop.f32.mrb[0].mxu0
        %v2165 = vadd.f32 0.0, %v2164
        %2166 = vmatprep.mubr.f32.mxu0 %v719
        %2167 = vmatmul.mubr.f32.gmra.mrb[0].mxu0 %v718
        %v2168 = vpop.f32.mrb[0].mxu0
        %v2169 = vadd.f32 0.0, %v2168
        %v2170 = vpop.f32.mrb[0].mxu0
        %v2171 = vadd.f32 0.0, %v2170
        %2172 = vmatprep.mubr.f32.mxu0 %v721
        %2173 = vmatmul.mubr.f32.gmra.mrb[0].mxu0 %v720
        %v2174 = vpop.f32.mrb[0].mxu0
        %v2175 = vadd.f32 0.0, %v2174
        %v2176 = vpop.f32.mrb[0].mxu0
        %v2177 = vadd.f32 0.0, %v2176
        %2178 = vmatprep.mubr.f32.mxu0 %v723
        %2179 = vmatmul.mubr.f32.gmra.mrb[0].mxu0 %v722
        %v2180 = vpop.f32.mrb[0].mxu0
        %v2181 = vadd.f32 0.0, %v2180
        %v2182 = vpop.f32.mrb[0].mxu0
        %v2183 = vadd.f32 0.0, %v2182
        %2184 = vmatprep.mubr.f32.mxu0 %v725
        %2185 = vmatmul.mubr.f32.gmra.mrb[0].mxu0 %v724
        %v2186 = vpop.f32.mrb[0].mxu0
        %v2187 = vadd.f32 0.0, %v2186
        %v2188 = vpop.f32.mrb[0].mxu0
        %v2189 = vadd.f32 0.0, %v2188
        %2190 = vmatprep.mubr.f32.mxu0 %v727
        %2191 = vmatmul.mubr.f32.gmra.mrb[0].mxu0 %v726
        %v2192 = vpop.f32.mrb[0].mxu0
        %v2193 = vadd.f32 0.0, %v2192
        %v2194 = vpop.f32.mrb[0].mxu0
        %v2195 = vadd.f32 0.0, %v2194
        %2196 = vmatprep.mubr.f32.mxu0 %v729
        %2197 = vmatmul.mubr.f32.gmra.mrb[0].mxu0 %v728
        %v2198 = vpop.f32.mrb[0].mxu0
        %v2199 = vadd.f32 0.0, %v2198
        %v2200 = vpop.f32.mrb[0].mxu0
        %v2201 = vadd.f32 0.0, %v2200
        %2202 = vmatprep.mubr.f32.mxu0 %v731
        %2203 = vmatmul.mubr.f32.gmra.mrb[0].mxu0 %v730
        %v2204 = vpop.f32.mrb[0].mxu0
        %v2205 = vadd.f32 0.0, %v2204
        %v2206 = vpop.f32.mrb[0].mxu0
        %v2207 = vadd.f32 0.0, %v2206
        %2208 = vmatprep.mubr.f32.mxu0 %v733
        %2209 = vmatmul.mubr.f32.gmra.mrb[0].mxu0 %v732
        %v2210 = vpop.f32.mrb[0].mxu0
        %v2211 = vadd.f32 0.0, %v2210
        %v2212 = vpop.f32.mrb[0].mxu0
        %v2213 = vadd.f32 0.0, %v2212
        %2214 = vmatprep.mubr.f32.mxu0 %v735
        %2215 = vmatmul.mubr.f32.gmra.mrb[0].mxu0 %v734
        %v2216 = vpop.f32.mrb[0].mxu0
        %v2217 = vadd.f32 0.0, %v2216
        %v2218 = vpop.f32.mrb[0].mxu0
        %v2219 = vadd.f32 0.0, %v2218
        %2220 = vmatprep.mubr.f32.mxu0 %v737
        %2221 = vmatmul.mubr.f32.gmra.mrb[0].mxu0 %v736
        %v2222 = vpop.f32.mrb[0].mxu0
        %v2223 = vadd.f32 0.0, %v2222
        %v2224 = vpop.f32.mrb[0].mxu0
        %v2225 = vadd.f32 0.0, %v2224
        %2226 = vdwg.mxu0
        %v2227 = vmax.f32 %v2133, %v2145
        %v2228 = vmax.f32 %v2135, %v2147
        %v2229 = vmax.f32 %v2139, %v2151
        %v2230 = vmax.f32 %v2141, %v2153
        %v2231 = vmax.f32 %v2227, %v2157
        %v2232 = vmax.f32 %v2228, %v2159
        %v2233 = vmax.f32 %v2229, %v2163
        %v2234 = vmax.f32 %v2230, %v2165
        %v2235 = vmax.f32 %v2231, %v2169
        %v2236 = vmax.f32 %v2232, %v2171
        %v2237 = vmax.f32 %v2233, %v2175
        %v2238 = vmax.f32 %v2234, %v2177
        %v2239 = vmax.f32 %v2235, %v2181
        %v2240 = vmax.f32 %v2236, %v2183
        %v2241 = vmax.f32 %v2237, %v2187
        %v2242 = vmax.f32 %v2238, %v2189
        %v2243 = vmax.f32 %v2239, %v2193
        %v2244 = vmax.f32 %v2240, %v2195
        %v2245 = vmax.f32 %v2241, %v2199
        %v2246 = vmax.f32 %v2242, %v2201
        %v2247 = vmax.f32 %v2243, %v2205
        %v2248 = vmax.f32 %v2244, %v2207
        %v2249 = vmax.f32 %v2245, %v2211
        %v2250 = vmax.f32 %v2246, %v2213
        %v2251 = vmax.f32 %v2247, %v2217
        %v2252 = vmax.f32 %v2248, %v2219
        %v2253 = vmax.f32 %v2249, %v2223
        %v2254 = vmax.f32 %v2250, %v2225
        %2256 = vset.pattern.permute.xlu0 16
        %2257 = vperm.xlu0 %2256, %v772
        %v2258 = vpop.permute.xlu0 %2257
        %vm2260 = vcmask 130048
        %v2261 = vsel %vm2260, %v772, 0
        %2263 = vmatprep.subr.mxu0 %v2252
        %2264 = vmatpush1.msra.mxu0 %v2251
        %2265 = vmatprep.subr.mxu0 %v2254
        %2266 = vmatpush1.msra.mxu0 %v2253
        %2267 = vmatprep.subr.mxu0 0.0
        %2268 = vmatpush1.msra.mxu0 0.0
        %2269 = vmatprep.subr.mxu0 0.0
        %2270 = vmatpush1.msra.mxu0 0.0
        %2271 = vmatprep.subr.mxu0 0.0
        %2272 = vmatpush1.msra.mxu0 0.0
        %2273 = vmatprep.subr.mxu0 0.0
        %2274 = vmatpush1.msra.mxu0 0.0
        %2275 = vmatprep.subr.mxu0 0.0
        %2276 = vmatpush1.msra.mxu0 0.0
        %2277 = vmatprep.subr.mxu0 0.0
        %2278 = vmatpush1.msra.mxu0 0.0
        %2279 = vmatprep.subr.mxu0 0.0
        %2280 = vmatpush1.msra.mxu0 0.0
        %2281 = vmatprep.subr.mxu0 0.0
        %2282 = vmatpush1.msra.mxu0 0.0
        %2283 = vmatprep.subr.mxu0 0.0
        %2284 = vmatpush1.msra.mxu0 0.0
        %2285 = vmatprep.subr.mxu0 0.0
        %2286 = vmatpush1.msra.mxu0 0.0
        %2287 = vmatprep.subr.mxu0 0.0
        %2288 = vmatpush1.msra.mxu0 0.0
        %2289 = vmatprep.subr.mxu0 0.0
        %2290 = vmatpush1.msra.mxu0 0.0
        %2291 = vmatprep.subr.mxu0 0.0
        %2292 = vmatpush1.msra.mxu0 0.0
        %2293 = vmatprep.subr.mxu0 0.0
        %2294 = vmatpush1.msra.mxu0 0.0
        %2295 = vmatprep.subr.mxu0 0.0
        %2296 = vmatpush1.msra.mxu0 0.0
        %2297 = vmatprep.subr.mxu0 0.0
        %2298 = vmatpush1.msra.mxu0 0.0
        %2299 = vmatprep.subr.mxu0 0.0
        %2300 = vmatpush1.msra.mxu0 0.0
        %2301 = vmatprep.subr.mxu0 0.0
        %2302 = vmatpush1.msra.mxu0 0.0
        %2303 = vmatprep.subr.mxu0 0.0
        %2304 = vmatpush1.msra.mxu0 0.0
        %2305 = vmatprep.subr.mxu0 0.0
        %2306 = vmatpush1.msra.mxu0 0.0
        %2307 = vmatprep.subr.mxu0 0.0
        %2308 = vmatpush1.msra.mxu0 0.0
        %2309 = vmatprep.subr.mxu0 0.0
        %2310 = vmatpush1.msra.mxu0 0.0
        %2311 = vmatprep.subr.mxu0 0.0
        %2312 = vmatpush1.msra.mxu0 0.0
        %2313 = vmatprep.subr.mxu0 0.0
        %2314 = vmatpush1.msra.mxu0 0.0
        %2315 = vmatprep.subr.mxu0 0.0
        %2316 = vmatpush1.msra.mxu0 0.0
        %2317 = vmatprep.subr.mxu0 0.0
        %2318 = vmatpush1.msra.mxu0 0.0
        %2319 = vmatprep.subr.mxu0 0.0
        %2320 = vmatpush1.msra.mxu0 0.0
        %2321 = vmatprep.subr.mxu0 0.0
        %2322 = vmatpush1.msra.mxu0 0.0
        %2323 = vmatprep.subr.mxu0 0.0
        %2324 = vmatpush1.msra.mxu0 0.0
        %2325 = vmatprep.subr.mxu0 0.0
        %2326 = vmatpush1.msra.mxu0 0.0
        %2327 = vmatprep.mubr.f32.mxu0 0.0
        %2328 = vmatmul.mubr.f32.gmra.mrb[0].mxu0 %v2261
        %v2329 = vpop.f32.mrb[0].mxu0
        %v2330 = vadd.f32 %v2258, %v2329
        %v2331 = vpop.f32.mrb[0].mxu0
        %v2332 = vadd.f32 %v2258, %v2331
        %2333 = vdwg.mxu0
        %v2334 = vmul.f32 %v2330, %v2330
        %v2335 = vmul.f32 %v2332, %v2332
        %v2336 = vrot.slane %v2334, 4
        %v2337 = vadd.f32 %v2334, %v2336
        %v2338 = vrot.slane %v2337, 2
        %v2339 = vadd.f32 %v2337, %v2338
        %v2340 = vrot.slane %v2339, 1
        %v2341 = vadd.f32 %v2339, %v2340
        %v2342 = vrot.slane %v2335, 4
        %v2343 = vadd.f32 %v2335, %v2342
        %v2344 = vrot.slane %v2343, 2
        %v2345 = vadd.f32 %v2343, %v2344
        %v2346 = vrot.slane %v2345, 1
        %v2347 = vadd.f32 %v2345, %v2346
        %v2348 = vmul.f32 %v2341, %v365
        %v2349 = vmul.f32 %v2347, %v365
        %v2350 = vadd.f32 %v2348, 1e-05
        %v2351 = vadd.f32 %v2349, 1e-05
        %v2352 = vrsqrt.pop %v2350
        %v2353 = vrsqrt.pop %v2351
        %2354 = vset.pattern.permute.xlu0 17
        %2355 = vperm.xlu0 %2354, %v772
        %v2356 = vpop.permute.xlu0 %2355
        %v2358 = vmul.f32 %v2352, %v2356
        %v2359 = vmul.f32 %v2353, %v2356
        %v2360 = vmul.f32 %v2330, %v2358
        %v2361 = vmul.f32 %v2332, %v2359
        %2362 = vset.pattern.permute.xlu0 18
        %2363 = vperm.xlu0 %2362, %v772
        %v2364 = vpop.permute.xlu0 %2363
        %v2366 = vadd.f32 %v2360, %v2364
        %v2367 = vadd.f32 %v2361, %v2364
        %2368 = vst [vmem:[%s340] sm:$0xff] %v2366
        %2369 = vst [vmem:[%s340 + $0x8] sm:$0xff] %v2367
        %s2370 = sand.u32 %s164, 1
        %s2371 = scalar_lea.sflag [#allocation5], %s2370
        %s2372 = sand.u32 %s164, 1
        %s2373 = smul.addr %s2372, 16
        %s2374 = scalar_lea.vmem [#allocation4], %s2373
        // Predicated region
        $region102: #{sparse_so3_conv.1} parent=92 // pred_check
          %p2375 = pneg %p174
        $region103: #{sparse_so3_conv.1} parent=92 // pred_check_branch
          %2377 = sbr.rel (%p2375) target = $region105
        $region104: #{sparse_so3_conv.1} parent=92 // pred_region
          %s2378 = smul.u32 2, %s20
          %s2380 = ssub.s32 256, 256
          %2381 = vsyncadd %s2371, %s2380
          %s2382 = smul.addr %s2378, 128
          %s2383 = scalar_lea.hbm %s6, %s2382
          %s2385 = sshll.u32 %s2374, 4
          %s2386 = int_to_ptr.vmem [resolvable:$true] %s2385
          %2388 = dma.vmem_to_hbm [thread:$0]  %s2386, 256, %s2383, %s2371
        $region105: #{sparse_so3_conv.1} parent=92 // pred_fallthru
          _
      $region93: #{sparse_so3_conv.1} parent=5 // pred_fallthru
        _
      %p2389 = scmp.le.s32.totalorder 2, %s15
      // Predicated region
      $region106: #{sparse_so3_conv.1} parent=5 // pred_check
        %p2390 = pneg %p2389
      $region107: #{sparse_so3_conv.1} parent=5 // pred_check_branch
        %2392 = sbr.rel (%p2390) target = $region109
      $region108: #{sparse_so3_conv.1} parent=5 // pred_region
        %s2393 = ssub.s32 %s15, 2
        // Predicated region
        $region110: #{sparse_so3_conv.1} parent=108 // pred_check
          %p2394 = pneg %p180
        $region111: #{sparse_so3_conv.1} parent=108 // pred_check_branch
          %2396 = sbr.rel (%p2394) target = $region113
        $region112: #{sparse_so3_conv.1} parent=108 // pred_region
          %s2397 = sand.u32 %s165, 1
          %s2398 = scalar_lea.sflag [#allocation5], %s2397
          %s2399 = sand.u32 %s165, 1
          %s2400 = smul.addr %s2399, 16
          %s2401 = scalar_lea.vmem [#allocation4], %s2400
          %2402 = dma.done %s2398, 256
        $region113: #{sparse_so3_conv.1} parent=108 // pred_fallthru
          _
      $region109: #{sparse_so3_conv.1} parent=5 // pred_fallthru
        _
    $region6: #{sparse_so3_conv.1} parent=1 // loop_footer
      %s19 = sadd.s32 1, %s15
    $region7: #{sparse_so3_conv.1} parent=1 // loop_footer_branch
      %14 = sbr.rel target = $region3
    $region8: #{sparse_so3_conv.1} parent=1 // loop_exit
      _
    %2403 = vsyncpa [#allocation5], 1
    %s2404 = scalar_lea.sflag [#allocation5], 1
    %2405 = vsyncpa %s2404, 1

</llo_original>
